<compile_context>
chip_gen: v5e
topology: v5e:2x2
jax: 0.10.0
libtpu: 0.0.40
codegen_flags: <defaults>
</compile_context>

<pallas_src>
import jax
import jax.numpy as jnp
from jax.experimental import pallas as pl
from jax.experimental.pallas import tpu as pltpu


def _lstm_tagger_kernel(sent_ref,            # SMEM (T,) int32 token ids
                        emb_ref,             # VMEM (V, E) embedding table
                        wxf_ref, wxb_ref,    # (E, 8H) input proj (fwd / bwd cols)
                        wh_ref, b_ref,       # (2H, 8H) recurrent, (1, 8H) bias
                        wtf_ref, wtb_ref,    # (H, Ttag) hidden2tag halves
                        btag_ref,            # (1, Ttag)
                        out_ref):            # (T, Ttag) log-probabilities
    T = out_ref.shape[0]
    H = wtf_ref.shape[0]
    H2 = 2 * H

    # ---- one-time loads: weights stay resident across the whole kernel ----
    wxf = wxf_ref[...]
    wxb = wxb_ref[...]
    wh = wh_ref[...]
    b = b_ref[...]

    # ---- fused embedding gather (forward order and time-reversed order) ---
    ef_rows = []
    eb_rows = []
    for t in range(T):
        ef_rows.append(emb_ref[pl.ds(sent_ref[t], 1), :])          # x[t]
        eb_rows.append(emb_ref[pl.ds(sent_ref[T - 1 - t], 1), :])  # x[T-1-t]
    EF = jnp.concatenate(ef_rows, axis=0)    # (T, E)  inputs for fwd direction
    EB = jnp.concatenate(eb_rows, axis=0)    # (T, E)  inputs for bwd direction

    # ---- precompute all input-gate projections in one shot ----------------
    # row t of gx = [fwd gates for x[t] | bwd gates for x[T-1-t]] (interleaved
    # gate-major layout), bias included exactly once.
    gx = (jnp.dot(EF, wxf, preferred_element_type=jnp.float32)
          + jnp.dot(EB, wxb, preferred_element_type=jnp.float32)
          + b)                               # (T, 8H)

    # ---- fused bidirectional recurrence (fully unrolled) ------------------
    # state = [fwd | bwd] packed on lanes; gate layout per row:
    #   [ i_f i_b | f_f f_b | g_f g_b | o_f o_b ], each block H lanes.
    h = jnp.zeros((1, H2), jnp.float32)
    c = jnp.zeros((1, H2), jnp.float32)
    hf_rows = [None] * T
    hb_rows = [None] * T
    for t in range(T):
        gates = gx[t:t + 1, :] + jnp.dot(h, wh,
                                         preferred_element_type=jnp.float32)
        i = jax.nn.sigmoid(gates[:, 0 * H2:1 * H2])
        f = jax.nn.sigmoid(gates[:, 1 * H2:2 * H2])
        g = jnp.tanh(gates[:, 2 * H2:3 * H2])
        o = jax.nn.sigmoid(gates[:, 3 * H2:4 * H2])
        c = f * c + i * g
        h = o * jnp.tanh(c)
        hf_rows[t] = h[:, 0:H]               # forward hidden -> output row t
        hb_rows[T - 1 - t] = h[:, H:H2]      # backward hidden -> row T-1-t

    HF = jnp.concatenate(hf_rows, axis=0)    # (T, H)
    HB = jnp.concatenate(hb_rows, axis=0)    # (T, H)

    # ---- hidden2tag linear + stable log_softmax(dim=-1) -------------------
    tag = (jnp.dot(HF, wtf_ref[...], preferred_element_type=jnp.float32)
           + jnp.dot(HB, wtb_ref[...], preferred_element_type=jnp.float32)
           + btag_ref[...])                  # (T, Ttag)
    m = jnp.max(tag, axis=-1, keepdims=True)
    z = tag - m
    out_ref[...] = z - jnp.log(jnp.sum(jnp.exp(z), axis=-1, keepdims=True))


@jax.jit
def lstm_tagger_forward(sentence, params):
    """Equivalent of LSTMTagger.forward (batch = 1, zero initial hidden)."""
    T = sentence.shape[0]
    Ttag = params["btag"].shape[-1]

    smem = pl.BlockSpec(memory_space=pltpu.MemorySpace.SMEM)
    vmem = pl.BlockSpec(memory_space=pltpu.MemorySpace.VMEM)
    return pl.pallas_call(
        _lstm_tagger_kernel,
        out_shape=jax.ShapeDtypeStruct((T, Ttag), jnp.float32),
        in_specs=[smem] + [vmem] * 8,
        out_specs=vmem,
    )(sentence.astype(jnp.int32),
      params["embedding"],
      params["wx_f8"], params["wx_b8"],
      params["wh8"], params["b8"],
      params["wtag_f"], params["wtag_b"], params["btag"])


def init_params(key, vocab_size, embedding_dim, hidden_dim, tagset_size):
    """Init mirroring PyTorch distributions, then pack for the kernel layout."""
    H, E, V, Ttag = hidden_dim, embedding_dim, vocab_size, tagset_size
    ks = jax.random.split(key, 12)
    k_lstm = 1.0 / jnp.sqrt(H)
    k_lin = 1.0 / jnp.sqrt(2 * H)

    def u(k, shape, s):
        return jax.random.uniform(k, shape, jnp.float32, -s, s)

    emb = jax.random.normal(ks[0], (V, E), jnp.float32)      # nn.Embedding

    # Dense per-direction LSTM weights, stored transposed (in, 4H),
    # PyTorch gate order i, f, g, o; bias = b_ih + b_hh.
    wih_f = u(ks[1], (E, 4 * H), k_lstm)
    whh_f = u(ks[2], (H, 4 * H), k_lstm)
    b_f = u(ks[3], (1, 4 * H), k_lstm) + u(ks[4], (1, 4 * H), k_lstm)
    wih_b = u(ks[5], (E, 4 * H), k_lstm)
    whh_b = u(ks[6], (H, 4 * H), k_lstm)
    b_b = u(ks[7], (1, 4 * H), k_lstm) + u(ks[8], (1, 4 * H), k_lstm)

    wtag = u(ks[9], (2 * H, Ttag), k_lin)                    # nn.Linear(2H, Ttag)
    btag = u(ks[10], (1, Ttag), k_lin)

    # ---- pack into interleaved gate-major / direction-minor layout --------
    # column blocks of width H: [ i_f i_b f_f f_b g_f g_b o_f o_b ]
    wx_f8 = jnp.zeros((E, 8 * H), jnp.float32)   # fwd cols only (bwd cols zero)
    wx_b8 = jnp.zeros((E, 8 * H), jnp.float32)   # bwd cols only (fwd cols zero)
    wh8 = jnp.zeros((2 * H, 8 * H), jnp.float32)  # block-diagonal recurrence
    b8 = jnp.zeros((1, 8 * H), jnp.float32)
    for k in range(4):                            # gate index: i, f, g, o
        src = slice(k * H, (k + 1) * H)
        dst_f = slice((2 * k) * H, (2 * k + 1) * H)
        dst_b = slice((2 * k + 1) * H, (2 * k + 2) * H)
        wx_f8 = wx_f8.at[:, dst_f].set(wih_f[:, src])
        wx_b8 = wx_b8.at[:, dst_b].set(wih_b[:, src])
        wh8 = wh8.at[0:H, dst_f].set(whh_f[:, src])
        wh8 = wh8.at[H:2 * H, dst_b].set(whh_b[:, src])
        b8 = b8.at[:, dst_f].set(b_f[:, src])
        b8 = b8.at[:, dst_b].set(b_b[:, src])

    return {
        "embedding": emb,
        "wx_f8": wx_f8, "wx_b8": wx_b8, "wh8": wh8, "b8": b8,
        "wtag_f": wtag[0:H, :], "wtag_b": wtag[H:2 * H, :], "btag": btag,
    }


if __name__ == "__main__":
    VOCAB_SIZE = 16
    EMBEDDING_DIM = 32
    HIDDEN_DIM = 32
    TAGSET_SIZE = 8
    SEQ_LEN = 8

    key = jax.random.PRNGKey(0)
    pkey, skey = jax.random.split(key)
    params = init_params(pkey, VOCAB_SIZE, EMBEDDING_DIM, HIDDEN_DIM,
                         TAGSET_SIZE)
    sentence = jax.random.randint(skey, (SEQ_LEN,), 0, VOCAB_SIZE,
                                  dtype=jnp.int32)

    tag_scores = lstm_tagger_forward(sentence, params)
    jax.block_until_ready(tag_scores)

    assert tag_scores.shape == (SEQ_LEN, TAGSET_SIZE)
    # log_softmax rows should sum (in prob space) to ~1
    assert jnp.allclose(jnp.exp(tag_scores).sum(axis=-1), 1.0, atol=1e-4)
    print("KERNEL_OK")
</pallas_src>

<mosaic_0001>
module attributes {stable_mosaic.version = 11 : i64} {
  func.func @_lstm_tagger_kernel(%arg0: memref<8xi32, #tpu.memory_space<smem>>, %arg1: memref<16x32xf32, #tpu.memory_space<vmem>>, %arg2: memref<32x256xf32, #tpu.memory_space<vmem>>, %arg3: memref<32x256xf32, #tpu.memory_space<vmem>>, %arg4: memref<64x256xf32, #tpu.memory_space<vmem>>, %arg5: memref<1x256xf32, #tpu.memory_space<vmem>>, %arg6: memref<32x8xf32, #tpu.memory_space<vmem>>, %arg7: memref<32x8xf32, #tpu.memory_space<vmem>>, %arg8: memref<1x8xf32, #tpu.memory_space<vmem>>, %arg9: memref<8x8xf32, #tpu.memory_space<vmem>>) attributes {dimension_semantics = [], scalar_prefetch = 0 : i64, scratch_operands = 0 : i64, tpu.core_type = #tpu.core_type<tc>} {
    %c0 = arith.constant 0 : index
    %c0_0 = arith.constant 0 : index
    %0 = vector.load %arg2[%c0, %c0_0] : memref<32x256xf32, #tpu.memory_space<vmem>>, vector<32x256xf32>
    %c0_1 = arith.constant 0 : index
    %c0_2 = arith.constant 0 : index
    %1 = vector.load %arg3[%c0_1, %c0_2] : memref<32x256xf32, #tpu.memory_space<vmem>>, vector<32x256xf32>
    %c0_3 = arith.constant 0 : index
    %c0_4 = arith.constant 0 : index
    %2 = vector.load %arg4[%c0_3, %c0_4] : memref<64x256xf32, #tpu.memory_space<vmem>>, vector<64x256xf32>
    %c0_5 = arith.constant 0 : index
    %c0_6 = arith.constant 0 : index
    %3 = vector.load %arg5[%c0_5, %c0_6] : memref<1x256xf32, #tpu.memory_space<vmem>>, vector<1x256xf32>
    %c0_7 = arith.constant 0 : index
    %4 = memref.load %arg0[%c0_7] : memref<8xi32, #tpu.memory_space<smem>>
    %5 = arith.index_cast %4 : i32 to index
    %c0_8 = arith.constant 0 : index
    %6 = vector.load %arg1[%5, %c0_8] : memref<16x32xf32, #tpu.memory_space<vmem>>, vector<1x32xf32>
    %c7 = arith.constant 7 : index
    %7 = memref.load %arg0[%c7] : memref<8xi32, #tpu.memory_space<smem>>
    %8 = arith.index_cast %7 : i32 to index
    %c0_9 = arith.constant 0 : index
    %9 = vector.load %arg1[%8, %c0_9] : memref<16x32xf32, #tpu.memory_space<vmem>>, vector<1x32xf32>
    %c1 = arith.constant 1 : index
    %10 = memref.load %arg0[%c1] : memref<8xi32, #tpu.memory_space<smem>>
    %11 = arith.index_cast %10 : i32 to index
    %c0_10 = arith.constant 0 : index
    %12 = vector.load %arg1[%11, %c0_10] : memref<16x32xf32, #tpu.memory_space<vmem>>, vector<1x32xf32>
    %c6 = arith.constant 6 : index
    %13 = memref.load %arg0[%c6] : memref<8xi32, #tpu.memory_space<smem>>
    %14 = arith.index_cast %13 : i32 to index
    %c0_11 = arith.constant 0 : index
    %15 = vector.load %arg1[%14, %c0_11] : memref<16x32xf32, #tpu.memory_space<vmem>>, vector<1x32xf32>
    %c2 = arith.constant 2 : index
    %16 = memref.load %arg0[%c2] : memref<8xi32, #tpu.memory_space<smem>>
    %17 = arith.index_cast %16 : i32 to index
    %c0_12 = arith.constant 0 : index
    %18 = vector.load %arg1[%17, %c0_12] : memref<16x32xf32, #tpu.memory_space<vmem>>, vector<1x32xf32>
    %c5 = arith.constant 5 : index
    %19 = memref.load %arg0[%c5] : memref<8xi32, #tpu.memory_space<smem>>
    %20 = arith.index_cast %19 : i32 to index
    %c0_13 = arith.constant 0 : index
    %21 = vector.load %arg1[%20, %c0_13] : memref<16x32xf32, #tpu.memory_space<vmem>>, vector<1x32xf32>
    %c3 = arith.constant 3 : index
    %22 = memref.load %arg0[%c3] : memref<8xi32, #tpu.memory_space<smem>>
    %23 = arith.index_cast %22 : i32 to index
    %c0_14 = arith.constant 0 : index
    %24 = vector.load %arg1[%23, %c0_14] : memref<16x32xf32, #tpu.memory_space<vmem>>, vector<1x32xf32>
    %c4 = arith.constant 4 : index
    %25 = memref.load %arg0[%c4] : memref<8xi32, #tpu.memory_space<smem>>
    %26 = arith.index_cast %25 : i32 to index
    %c0_15 = arith.constant 0 : index
    %27 = vector.load %arg1[%26, %c0_15] : memref<16x32xf32, #tpu.memory_space<vmem>>, vector<1x32xf32>
    %c4_16 = arith.constant 4 : index
    %28 = memref.load %arg0[%c4_16] : memref<8xi32, #tpu.memory_space<smem>>
    %29 = arith.index_cast %28 : i32 to index
    %c0_17 = arith.constant 0 : index
    %30 = vector.load %arg1[%29, %c0_17] : memref<16x32xf32, #tpu.memory_space<vmem>>, vector<1x32xf32>
    %c3_18 = arith.constant 3 : index
    %31 = memref.load %arg0[%c3_18] : memref<8xi32, #tpu.memory_space<smem>>
    %32 = arith.index_cast %31 : i32 to index
    %c0_19 = arith.constant 0 : index
    %33 = vector.load %arg1[%32, %c0_19] : memref<16x32xf32, #tpu.memory_space<vmem>>, vector<1x32xf32>
    %c5_20 = arith.constant 5 : index
    %34 = memref.load %arg0[%c5_20] : memref<8xi32, #tpu.memory_space<smem>>
    %35 = arith.index_cast %34 : i32 to index
    %c0_21 = arith.constant 0 : index
    %36 = vector.load %arg1[%35, %c0_21] : memref<16x32xf32, #tpu.memory_space<vmem>>, vector<1x32xf32>
    %c2_22 = arith.constant 2 : index
    %37 = memref.load %arg0[%c2_22] : memref<8xi32, #tpu.memory_space<smem>>
    %38 = arith.index_cast %37 : i32 to index
    %c0_23 = arith.constant 0 : index
    %39 = vector.load %arg1[%38, %c0_23] : memref<16x32xf32, #tpu.memory_space<vmem>>, vector<1x32xf32>
    %c6_24 = arith.constant 6 : index
    %40 = memref.load %arg0[%c6_24] : memref<8xi32, #tpu.memory_space<smem>>
    %41 = arith.index_cast %40 : i32 to index
    %c0_25 = arith.constant 0 : index
    %42 = vector.load %arg1[%41, %c0_25] : memref<16x32xf32, #tpu.memory_space<vmem>>, vector<1x32xf32>
    %c1_26 = arith.constant 1 : index
    %43 = memref.load %arg0[%c1_26] : memref<8xi32, #tpu.memory_space<smem>>
    %44 = arith.index_cast %43 : i32 to index
    %c0_27 = arith.constant 0 : index
    %45 = vector.load %arg1[%44, %c0_27] : memref<16x32xf32, #tpu.memory_space<vmem>>, vector<1x32xf32>
    %c7_28 = arith.constant 7 : index
    %46 = memref.load %arg0[%c7_28] : memref<8xi32, #tpu.memory_space<smem>>
    %47 = arith.index_cast %46 : i32 to index
    %c0_29 = arith.constant 0 : index
    %48 = vector.load %arg1[%47, %c0_29] : memref<16x32xf32, #tpu.memory_space<vmem>>, vector<1x32xf32>
    %c0_30 = arith.constant 0 : index
    %49 = memref.load %arg0[%c0_30] : memref<8xi32, #tpu.memory_space<smem>>
    %50 = arith.index_cast %49 : i32 to index
    %c0_31 = arith.constant 0 : index
    %51 = vector.load %arg1[%50, %c0_31] : memref<16x32xf32, #tpu.memory_space<vmem>>, vector<1x32xf32>
    %52 = tpu.concatenate %6, %12, %18, %24, %30, %36, %42, %48 in 0 : vector<1x32xf32>, vector<1x32xf32>, vector<1x32xf32>, vector<1x32xf32>, vector<1x32xf32>, vector<1x32xf32>, vector<1x32xf32>, vector<1x32xf32> -> vector<8x32xf32>
    %53 = tpu.concatenate %9, %15, %21, %27, %33, %39, %45, %51 in 0 : vector<1x32xf32>, vector<1x32xf32>, vector<1x32xf32>, vector<1x32xf32>, vector<1x32xf32>, vector<1x32xf32>, vector<1x32xf32>, vector<1x32xf32> -> vector<8x32xf32>
    %cst = arith.constant dense<0.000000e+00> : vector<8x256xf32>
    %54 = tpu.matmul %52, %0, %cst {dimension_numbers = #tpu.dot_dimension_numbers<[1], [0], [0], [1], [0, 0, 1, 1], [], []>} : vector<8x32xf32>, vector<32x256xf32>, vector<8x256xf32> -> vector<8x256xf32>
    %cst_32 = arith.constant dense<0.000000e+00> : vector<8x256xf32>
    %55 = tpu.matmul %53, %1, %cst_32 {dimension_numbers = #tpu.dot_dimension_numbers<[1], [0], [0], [1], [0, 0, 1, 1], [], []>} : vector<8x32xf32>, vector<32x256xf32>, vector<8x256xf32> -> vector<8x256xf32>
    %56 = arith.addf %54, %55 : vector<8x256xf32>
    %57 = vector.broadcast %3 : vector<1x256xf32> to vector<8x256xf32>
    %58 = arith.addf %56, %57 : vector<8x256xf32>
    %cst_33 = arith.constant 0.000000e+00 : f32
    %59 = vector.broadcast %cst_33 : f32 to vector<1x64xf32>
    %cst_34 = arith.constant 0.000000e+00 : f32
    %60 = vector.broadcast %cst_34 : f32 to vector<1x64xf32>
    %61 = vector.extract_strided_slice %58 {offsets = [0, 0], sizes = [1, 256], strides = [1, 1]} : vector<8x256xf32> to vector<1x256xf32>
    %cst_35 = arith.constant dense<0.000000e+00> : vector<1x256xf32>
    %62 = tpu.matmul %59, %2, %cst_35 {dimension_numbers = #tpu.dot_dimension_numbers<[1], [0], [0], [1], [0, 0, 1, 1], [], []>} : vector<1x64xf32>, vector<64x256xf32>, vector<1x256xf32> -> vector<1x256xf32>
    %63 = arith.addf %61, %62 : vector<1x256xf32>
    %64 = vector.extract_strided_slice %63 {offsets = [0, 0], sizes = [1, 64], strides = [1, 1]} : vector<1x256xf32> to vector<1x64xf32>
    %65 = arith.negf %64 : vector<1x64xf32>
    %66 = math.exp %65 : vector<1x64xf32>
    %cst_36 = arith.constant 1.000000e+00 : f32
    %67 = vector.broadcast %cst_36 : f32 to vector<1x64xf32>
    %68 = arith.addf %67, %66 : vector<1x64xf32>
    %69 = arith.divf %67, %68 : vector<1x64xf32>
    %70 = vector.extract_strided_slice %63 {offsets = [0, 64], sizes = [1, 64], strides = [1, 1]} : vector<1x256xf32> to vector<1x64xf32>
    %71 = arith.negf %70 : vector<1x64xf32>
    %72 = math.exp %71 : vector<1x64xf32>
    %cst_37 = arith.constant 1.000000e+00 : f32
    %73 = vector.broadcast %cst_37 : f32 to vector<1x64xf32>
    %74 = arith.addf %73, %72 : vector<1x64xf32>
    %75 = arith.divf %73, %74 : vector<1x64xf32>
    %76 = vector.extract_strided_slice %63 {offsets = [0, 128], sizes = [1, 64], strides = [1, 1]} : vector<1x256xf32> to vector<1x64xf32>
    %77 = math.tanh %76 : vector<1x64xf32>
    %78 = vector.extract_strided_slice %63 {offsets = [0, 192], sizes = [1, 64], strides = [1, 1]} : vector<1x256xf32> to vector<1x64xf32>
    %79 = arith.negf %78 : vector<1x64xf32>
    %80 = math.exp %79 : vector<1x64xf32>
    %cst_38 = arith.constant 1.000000e+00 : f32
    %81 = vector.broadcast %cst_38 : f32 to vector<1x64xf32>
    %82 = arith.addf %81, %80 : vector<1x64xf32>
    %83 = arith.divf %81, %82 : vector<1x64xf32>
    %84 = arith.mulf %75, %60 : vector<1x64xf32>
    %85 = arith.mulf %69, %77 : vector<1x64xf32>
    %86 = arith.addf %84, %85 : vector<1x64xf32>
    %87 = math.tanh %86 : vector<1x64xf32>
    %88 = arith.mulf %83, %87 : vector<1x64xf32>
    %89 = vector.extract_strided_slice %88 {offsets = [0, 0], sizes = [1, 32], strides = [1, 1]} : vector<1x64xf32> to vector<1x32xf32>
    %90 = vector.extract_strided_slice %88 {offsets = [0, 32], sizes = [1, 32], strides = [1, 1]} : vector<1x64xf32> to vector<1x32xf32>
    %91 = vector.extract_strided_slice %58 {offsets = [1, 0], sizes = [1, 256], strides = [1, 1]} : vector<8x256xf32> to vector<1x256xf32>
    %cst_39 = arith.constant dense<0.000000e+00> : vector<1x256xf32>
    %92 = tpu.matmul %88, %2, %cst_39 {dimension_numbers = #tpu.dot_dimension_numbers<[1], [0], [0], [1], [0, 0, 1, 1], [], []>} : vector<1x64xf32>, vector<64x256xf32>, vector<1x256xf32> -> vector<1x256xf32>
    %93 = arith.addf %91, %92 : vector<1x256xf32>
    %94 = vector.extract_strided_slice %93 {offsets = [0, 0], sizes = [1, 64], strides = [1, 1]} : vector<1x256xf32> to vector<1x64xf32>
    %95 = arith.negf %94 : vector<1x64xf32>
    %96 = math.exp %95 : vector<1x64xf32>
    %cst_40 = arith.constant 1.000000e+00 : f32
    %97 = vector.broadcast %cst_40 : f32 to vector<1x64xf32>
    %98 = arith.addf %97, %96 : vector<1x64xf32>
    %99 = arith.divf %97, %98 : vector<1x64xf32>
    %100 = vector.extract_strided_slice %93 {offsets = [0, 64], sizes = [1, 64], strides = [1, 1]} : vector<1x256xf32> to vector<1x64xf32>
    %101 = arith.negf %100 : vector<1x64xf32>
    %102 = math.exp %101 : vector<1x64xf32>
    %cst_41 = arith.constant 1.000000e+00 : f32
    %103 = vector.broadcast %cst_41 : f32 to vector<1x64xf32>
    %104 = arith.addf %103, %102 : vector<1x64xf32>
    %105 = arith.divf %103, %104 : vector<1x64xf32>
    %106 = vector.extract_strided_slice %93 {offsets = [0, 128], sizes = [1, 64], strides = [1, 1]} : vector<1x256xf32> to vector<1x64xf32>
    %107 = math.tanh %106 : vector<1x64xf32>
    %108 = vector.extract_strided_slice %93 {offsets = [0, 192], sizes = [1, 64], strides = [1, 1]} : vector<1x256xf32> to vector<1x64xf32>
    %109 = arith.negf %108 : vector<1x64xf32>
    %110 = math.exp %109 : vector<1x64xf32>
    %cst_42 = arith.constant 1.000000e+00 : f32
    %111 = vector.broadcast %cst_42 : f32 to vector<1x64xf32>
    %112 = arith.addf %111, %110 : vector<1x64xf32>
    %113 = arith.divf %111, %112 : vector<1x64xf32>
    %114 = arith.mulf %105, %86 : vector<1x64xf32>
    %115 = arith.mulf %99, %107 : vector<1x64xf32>
    %116 = arith.addf %114, %115 : vector<1x64xf32>
    %117 = math.tanh %116 : vector<1x64xf32>
    %118 = arith.mulf %113, %117 : vector<1x64xf32>
    %119 = vector.extract_strided_slice %118 {offsets = [0, 0], sizes = [1, 32], strides = [1, 1]} : vector<1x64xf32> to vector<1x32xf32>
    %120 = vector.extract_strided_slice %118 {offsets = [0, 32], sizes = [1, 32], strides = [1, 1]} : vector<1x64xf32> to vector<1x32xf32>
    %121 = vector.extract_strided_slice %58 {offsets = [2, 0], sizes = [1, 256], strides = [1, 1]} : vector<8x256xf32> to vector<1x256xf32>
    %cst_43 = arith.constant dense<0.000000e+00> : vector<1x256xf32>
    %122 = tpu.matmul %118, %2, %cst_43 {dimension_numbers = #tpu.dot_dimension_numbers<[1], [0], [0], [1], [0, 0, 1, 1], [], []>} : vector<1x64xf32>, vector<64x256xf32>, vector<1x256xf32> -> vector<1x256xf32>
    %123 = arith.addf %121, %122 : vector<1x256xf32>
    %124 = vector.extract_strided_slice %123 {offsets = [0, 0], sizes = [1, 64], strides = [1, 1]} : vector<1x256xf32> to vector<1x64xf32>
    %125 = arith.negf %124 : vector<1x64xf32>
    %126 = math.exp %125 : vector<1x64xf32>
    %cst_44 = arith.constant 1.000000e+00 : f32
    %127 = vector.broadcast %cst_44 : f32 to vector<1x64xf32>
    %128 = arith.addf %127, %126 : vector<1x64xf32>
    %129 = arith.divf %127, %128 : vector<1x64xf32>
    %130 = vector.extract_strided_slice %123 {offsets = [0, 64], sizes = [1, 64], strides = [1, 1]} : vector<1x256xf32> to vector<1x64xf32>
    %131 = arith.negf %130 : vector<1x64xf32>
    %132 = math.exp %131 : vector<1x64xf32>
    %cst_45 = arith.constant 1.000000e+00 : f32
    %133 = vector.broadcast %cst_45 : f32 to vector<1x64xf32>
    %134 = arith.addf %133, %132 : vector<1x64xf32>
    %135 = arith.divf %133, %134 : vector<1x64xf32>
    %136 = vector.extract_strided_slice %123 {offsets = [0, 128], sizes = [1, 64], strides = [1, 1]} : vector<1x256xf32> to vector<1x64xf32>
    %137 = math.tanh %136 : vector<1x64xf32>
    %138 = vector.extract_strided_slice %123 {offsets = [0, 192], sizes = [1, 64], strides = [1, 1]} : vector<1x256xf32> to vector<1x64xf32>
    %139 = arith.negf %138 : vector<1x64xf32>
    %140 = math.exp %139 : vector<1x64xf32>
    %cst_46 = arith.constant 1.000000e+00 : f32
    %141 = vector.broadcast %cst_46 : f32 to vector<1x64xf32>
    %142 = arith.addf %141, %140 : vector<1x64xf32>
    %143 = arith.divf %141, %142 : vector<1x64xf32>
    %144 = arith.mulf %135, %116 : vector<1x64xf32>
    %145 = arith.mulf %129, %137 : vector<1x64xf32>
    %146 = arith.addf %144, %145 : vector<1x64xf32>
    %147 = math.tanh %146 : vector<1x64xf32>
    %148 = arith.mulf %143, %147 : vector<1x64xf32>
    %149 = vector.extract_strided_slice %148 {offsets = [0, 0], sizes = [1, 32], strides = [1, 1]} : vector<1x64xf32> to vector<1x32xf32>
    %150 = vector.extract_strided_slice %148 {offsets = [0, 32], sizes = [1, 32], strides = [1, 1]} : vector<1x64xf32> to vector<1x32xf32>
    %151 = vector.extract_strided_slice %58 {offsets = [3, 0], sizes = [1, 256], strides = [1, 1]} : vector<8x256xf32> to vector<1x256xf32>
    %cst_47 = arith.constant dense<0.000000e+00> : vector<1x256xf32>
    %152 = tpu.matmul %148, %2, %cst_47 {dimension_numbers = #tpu.dot_dimension_numbers<[1], [0], [0], [1], [0, 0, 1, 1], [], []>} : vector<1x64xf32>, vector<64x256xf32>, vector<1x256xf32> -> vector<1x256xf32>
    %153 = arith.addf %151, %152 : vector<1x256xf32>
    %154 = vector.extract_strided_slice %153 {offsets = [0, 0], sizes = [1, 64], strides = [1, 1]} : vector<1x256xf32> to vector<1x64xf32>
    %155 = arith.negf %154 : vector<1x64xf32>
    %156 = math.exp %155 : vector<1x64xf32>
    %cst_48 = arith.constant 1.000000e+00 : f32
    %157 = vector.broadcast %cst_48 : f32 to vector<1x64xf32>
    %158 = arith.addf %157, %156 : vector<1x64xf32>
    %159 = arith.divf %157, %158 : vector<1x64xf32>
    %160 = vector.extract_strided_slice %153 {offsets = [0, 64], sizes = [1, 64], strides = [1, 1]} : vector<1x256xf32> to vector<1x64xf32>
    %161 = arith.negf %160 : vector<1x64xf32>
    %162 = math.exp %161 : vector<1x64xf32>
    %cst_49 = arith.constant 1.000000e+00 : f32
    %163 = vector.broadcast %cst_49 : f32 to vector<1x64xf32>
    %164 = arith.addf %163, %162 : vector<1x64xf32>
    %165 = arith.divf %163, %164 : vector<1x64xf32>
    %166 = vector.extract_strided_slice %153 {offsets = [0, 128], sizes = [1, 64], strides = [1, 1]} : vector<1x256xf32> to vector<1x64xf32>
    %167 = math.tanh %166 : vector<1x64xf32>
    %168 = vector.extract_strided_slice %153 {offsets = [0, 192], sizes = [1, 64], strides = [1, 1]} : vector<1x256xf32> to vector<1x64xf32>
    %169 = arith.negf %168 : vector<1x64xf32>
    %170 = math.exp %169 : vector<1x64xf32>
    %cst_50 = arith.constant 1.000000e+00 : f32
    %171 = vector.broadcast %cst_50 : f32 to vector<1x64xf32>
    %172 = arith.addf %171, %170 : vector<1x64xf32>
    %173 = arith.divf %171, %172 : vector<1x64xf32>
    %174 = arith.mulf %165, %146 : vector<1x64xf32>
    %175 = arith.mulf %159, %167 : vector<1x64xf32>
    %176 = arith.addf %174, %175 : vector<1x64xf32>
    %177 = math.tanh %176 : vector<1x64xf32>
    %178 = arith.mulf %173, %177 : vector<1x64xf32>
    %179 = vector.extract_strided_slice %178 {offsets = [0, 0], sizes = [1, 32], strides = [1, 1]} : vector<1x64xf32> to vector<1x32xf32>
    %180 = vector.extract_strided_slice %178 {offsets = [0, 32], sizes = [1, 32], strides = [1, 1]} : vector<1x64xf32> to vector<1x32xf32>
    %181 = vector.extract_strided_slice %58 {offsets = [4, 0], sizes = [1, 256], strides = [1, 1]} : vector<8x256xf32> to vector<1x256xf32>
    %cst_51 = arith.constant dense<0.000000e+00> : vector<1x256xf32>
    %182 = tpu.matmul %178, %2, %cst_51 {dimension_numbers = #tpu.dot_dimension_numbers<[1], [0], [0], [1], [0, 0, 1, 1], [], []>} : vector<1x64xf32>, vector<64x256xf32>, vector<1x256xf32> -> vector<1x256xf32>
    %183 = arith.addf %181, %182 : vector<1x256xf32>
    %184 = vector.extract_strided_slice %183 {offsets = [0, 0], sizes = [1, 64], strides = [1, 1]} : vector<1x256xf32> to vector<1x64xf32>
    %185 = arith.negf %184 : vector<1x64xf32>
    %186 = math.exp %185 : vector<1x64xf32>
    %cst_52 = arith.constant 1.000000e+00 : f32
    %187 = vector.broadcast %cst_52 : f32 to vector<1x64xf32>
    %188 = arith.addf %187, %186 : vector<1x64xf32>
    %189 = arith.divf %187, %188 : vector<1x64xf32>
    %190 = vector.extract_strided_slice %183 {offsets = [0, 64], sizes = [1, 64], strides = [1, 1]} : vector<1x256xf32> to vector<1x64xf32>
    %191 = arith.negf %190 : vector<1x64xf32>
    %192 = math.exp %191 : vector<1x64xf32>
    %cst_53 = arith.constant 1.000000e+00 : f32
    %193 = vector.broadcast %cst_53 : f32 to vector<1x64xf32>
    %194 = arith.addf %193, %192 : vector<1x64xf32>
    %195 = arith.divf %193, %194 : vector<1x64xf32>
    %196 = vector.extract_strided_slice %183 {offsets = [0, 128], sizes = [1, 64], strides = [1, 1]} : vector<1x256xf32> to vector<1x64xf32>
    %197 = math.tanh %196 : vector<1x64xf32>
    %198 = vector.extract_strided_slice %183 {offsets = [0, 192], sizes = [1, 64], strides = [1, 1]} : vector<1x256xf32> to vector<1x64xf32>
    %199 = arith.negf %198 : vector<1x64xf32>
    %200 = math.exp %199 : vector<1x64xf32>
    %cst_54 = arith.constant 1.000000e+00 : f32
    %201 = vector.broadcast %cst_54 : f32 to vector<1x64xf32>
    %202 = arith.addf %201, %200 : vector<1x64xf32>
    %203 = arith.divf %201, %202 : vector<1x64xf32>
    %204 = arith.mulf %195, %176 : vector<1x64xf32>
    %205 = arith.mulf %189, %197 : vector<1x64xf32>
    %206 = arith.addf %204, %205 : vector<1x64xf32>
    %207 = math.tanh %206 : vector<1x64xf32>
    %208 = arith.mulf %203, %207 : vector<1x64xf32>
    %209 = vector.extract_strided_slice %208 {offsets = [0, 0], sizes = [1, 32], strides = [1, 1]} : vector<1x64xf32> to vector<1x32xf32>
    %210 = vector.extract_strided_slice %208 {offsets = [0, 32], sizes = [1, 32], strides = [1, 1]} : vector<1x64xf32> to vector<1x32xf32>
    %211 = vector.extract_strided_slice %58 {offsets = [5, 0], sizes = [1, 256], strides = [1, 1]} : vector<8x256xf32> to vector<1x256xf32>
    %cst_55 = arith.constant dense<0.000000e+00> : vector<1x256xf32>
    %212 = tpu.matmul %208, %2, %cst_55 {dimension_numbers = #tpu.dot_dimension_numbers<[1], [0], [0], [1], [0, 0, 1, 1], [], []>} : vector<1x64xf32>, vector<64x256xf32>, vector<1x256xf32> -> vector<1x256xf32>
    %213 = arith.addf %211, %212 : vector<1x256xf32>
    %214 = vector.extract_strided_slice %213 {offsets = [0, 0], sizes = [1, 64], strides = [1, 1]} : vector<1x256xf32> to vector<1x64xf32>
    %215 = arith.negf %214 : vector<1x64xf32>
    %216 = math.exp %215 : vector<1x64xf32>
    %cst_56 = arith.constant 1.000000e+00 : f32
    %217 = vector.broadcast %cst_56 : f32 to vector<1x64xf32>
    %218 = arith.addf %217, %216 : vector<1x64xf32>
    %219 = arith.divf %217, %218 : vector<1x64xf32>
    %220 = vector.extract_strided_slice %213 {offsets = [0, 64], sizes = [1, 64], strides = [1, 1]} : vector<1x256xf32> to vector<1x64xf32>
    %221 = arith.negf %220 : vector<1x64xf32>
    %222 = math.exp %221 : vector<1x64xf32>
    %cst_57 = arith.constant 1.000000e+00 : f32
    %223 = vector.broadcast %cst_57 : f32 to vector<1x64xf32>
    %224 = arith.addf %223, %222 : vector<1x64xf32>
    %225 = arith.divf %223, %224 : vector<1x64xf32>
    %226 = vector.extract_strided_slice %213 {offsets = [0, 128], sizes = [1, 64], strides = [1, 1]} : vector<1x256xf32> to vector<1x64xf32>
    %227 = math.tanh %226 : vector<1x64xf32>
    %228 = vector.extract_strided_slice %213 {offsets = [0, 192], sizes = [1, 64], strides = [1, 1]} : vector<1x256xf32> to vector<1x64xf32>
    %229 = arith.negf %228 : vector<1x64xf32>
    %230 = math.exp %229 : vector<1x64xf32>
    %cst_58 = arith.constant 1.000000e+00 : f32
    %231 = vector.broadcast %cst_58 : f32 to vector<1x64xf32>
    %232 = arith.addf %231, %230 : vector<1x64xf32>
    %233 = arith.divf %231, %232 : vector<1x64xf32>
    %234 = arith.mulf %225, %206 : vector<1x64xf32>
    %235 = arith.mulf %219, %227 : vector<1x64xf32>
    %236 = arith.addf %234, %235 : vector<1x64xf32>
    %237 = math.tanh %236 : vector<1x64xf32>
    %238 = arith.mulf %233, %237 : vector<1x64xf32>
    %239 = vector.extract_strided_slice %238 {offsets = [0, 0], sizes = [1, 32], strides = [1, 1]} : vector<1x64xf32> to vector<1x32xf32>
    %240 = vector.extract_strided_slice %238 {offsets = [0, 32], sizes = [1, 32], strides = [1, 1]} : vector<1x64xf32> to vector<1x32xf32>
    %241 = vector.extract_strided_slice %58 {offsets = [6, 0], sizes = [1, 256], strides = [1, 1]} : vector<8x256xf32> to vector<1x256xf32>
    %cst_59 = arith.constant dense<0.000000e+00> : vector<1x256xf32>
    %242 = tpu.matmul %238, %2, %cst_59 {dimension_numbers = #tpu.dot_dimension_numbers<[1], [0], [0], [1], [0, 0, 1, 1], [], []>} : vector<1x64xf32>, vector<64x256xf32>, vector<1x256xf32> -> vector<1x256xf32>
    %243 = arith.addf %241, %242 : vector<1x256xf32>
    %244 = vector.extract_strided_slice %243 {offsets = [0, 0], sizes = [1, 64], strides = [1, 1]} : vector<1x256xf32> to vector<1x64xf32>
    %245 = arith.negf %244 : vector<1x64xf32>
    %246 = math.exp %245 : vector<1x64xf32>
    %cst_60 = arith.constant 1.000000e+00 : f32
    %247 = vector.broadcast %cst_60 : f32 to vector<1x64xf32>
    %248 = arith.addf %247, %246 : vector<1x64xf32>
    %249 = arith.divf %247, %248 : vector<1x64xf32>
    %250 = vector.extract_strided_slice %243 {offsets = [0, 64], sizes = [1, 64], strides = [1, 1]} : vector<1x256xf32> to vector<1x64xf32>
    %251 = arith.negf %250 : vector<1x64xf32>
    %252 = math.exp %251 : vector<1x64xf32>
    %cst_61 = arith.constant 1.000000e+00 : f32
    %253 = vector.broadcast %cst_61 : f32 to vector<1x64xf32>
    %254 = arith.addf %253, %252 : vector<1x64xf32>
    %255 = arith.divf %253, %254 : vector<1x64xf32>
    %256 = vector.extract_strided_slice %243 {offsets = [0, 128], sizes = [1, 64], strides = [1, 1]} : vector<1x256xf32> to vector<1x64xf32>
    %257 = math.tanh %256 : vector<1x64xf32>
    %258 = vector.extract_strided_slice %243 {offsets = [0, 192], sizes = [1, 64], strides = [1, 1]} : vector<1x256xf32> to vector<1x64xf32>
    %259 = arith.negf %258 : vector<1x64xf32>
    %260 = math.exp %259 : vector<1x64xf32>
    %cst_62 = arith.constant 1.000000e+00 : f32
    %261 = vector.broadcast %cst_62 : f32 to vector<1x64xf32>
    %262 = arith.addf %261, %260 : vector<1x64xf32>
    %263 = arith.divf %261, %262 : vector<1x64xf32>
    %264 = arith.mulf %255, %236 : vector<1x64xf32>
    %265 = arith.mulf %249, %257 : vector<1x64xf32>
    %266 = arith.addf %264, %265 : vector<1x64xf32>
    %267 = math.tanh %266 : vector<1x64xf32>
    %268 = arith.mulf %263, %267 : vector<1x64xf32>
    %269 = vector.extract_strided_slice %268 {offsets = [0, 0], sizes = [1, 32], strides = [1, 1]} : vector<1x64xf32> to vector<1x32xf32>
    %270 = vector.extract_strided_slice %268 {offsets = [0, 32], sizes = [1, 32], strides = [1, 1]} : vector<1x64xf32> to vector<1x32xf32>
    %271 = vector.extract_strided_slice %58 {offsets = [7, 0], sizes = [1, 256], strides = [1, 1]} : vector<8x256xf32> to vector<1x256xf32>
    %cst_63 = arith.constant dense<0.000000e+00> : vector<1x256xf32>
    %272 = tpu.matmul %268, %2, %cst_63 {dimension_numbers = #tpu.dot_dimension_numbers<[1], [0], [0], [1], [0, 0, 1, 1], [], []>} : vector<1x64xf32>, vector<64x256xf32>, vector<1x256xf32> -> vector<1x256xf32>
    %273 = arith.addf %271, %272 : vector<1x256xf32>
    %274 = vector.extract_strided_slice %273 {offsets = [0, 0], sizes = [1, 64], strides = [1, 1]} : vector<1x256xf32> to vector<1x64xf32>
    %275 = arith.negf %274 : vector<1x64xf32>
    %276 = math.exp %275 : vector<1x64xf32>
    %cst_64 = arith.constant 1.000000e+00 : f32
    %277 = vector.broadcast %cst_64 : f32 to vector<1x64xf32>
    %278 = arith.addf %277, %276 : vector<1x64xf32>
    %279 = arith.divf %277, %278 : vector<1x64xf32>
    %280 = vector.extract_strided_slice %273 {offsets = [0, 64], sizes = [1, 64], strides = [1, 1]} : vector<1x256xf32> to vector<1x64xf32>
    %281 = arith.negf %280 : vector<1x64xf32>
    %282 = math.exp %281 : vector<1x64xf32>
    %cst_65 = arith.constant 1.000000e+00 : f32
    %283 = vector.broadcast %cst_65 : f32 to vector<1x64xf32>
    %284 = arith.addf %283, %282 : vector<1x64xf32>
    %285 = arith.divf %283, %284 : vector<1x64xf32>
    %286 = vector.extract_strided_slice %273 {offsets = [0, 128], sizes = [1, 64], strides = [1, 1]} : vector<1x256xf32> to vector<1x64xf32>
    %287 = math.tanh %286 : vector<1x64xf32>
    %288 = vector.extract_strided_slice %273 {offsets = [0, 192], sizes = [1, 64], strides = [1, 1]} : vector<1x256xf32> to vector<1x64xf32>
    %289 = arith.negf %288 : vector<1x64xf32>
    %290 = math.exp %289 : vector<1x64xf32>
    %cst_66 = arith.constant 1.000000e+00 : f32
    %291 = vector.broadcast %cst_66 : f32 to vector<1x64xf32>
    %292 = arith.addf %291, %290 : vector<1x64xf32>
    %293 = arith.divf %291, %292 : vector<1x64xf32>
    %294 = arith.mulf %285, %266 : vector<1x64xf32>
    %295 = arith.mulf %279, %287 : vector<1x64xf32>
    %296 = arith.addf %294, %295 : vector<1x64xf32>
    %297 = math.tanh %296 : vector<1x64xf32>
    %298 = arith.mulf %293, %297 : vector<1x64xf32>
    %299 = vector.extract_strided_slice %298 {offsets = [0, 0], sizes = [1, 32], strides = [1, 1]} : vector<1x64xf32> to vector<1x32xf32>
    %300 = vector.extract_strided_slice %298 {offsets = [0, 32], sizes = [1, 32], strides = [1, 1]} : vector<1x64xf32> to vector<1x32xf32>
    %301 = tpu.concatenate %89, %119, %149, %179, %209, %239, %269, %299 in 0 : vector<1x32xf32>, vector<1x32xf32>, vector<1x32xf32>, vector<1x32xf32>, vector<1x32xf32>, vector<1x32xf32>, vector<1x32xf32>, vector<1x32xf32> -> vector<8x32xf32>
    %302 = tpu.concatenate %300, %270, %240, %210, %180, %150, %120, %90 in 0 : vector<1x32xf32>, vector<1x32xf32>, vector<1x32xf32>, vector<1x32xf32>, vector<1x32xf32>, vector<1x32xf32>, vector<1x32xf32>, vector<1x32xf32> -> vector<8x32xf32>
    %c0_67 = arith.constant 0 : index
    %c0_68 = arith.constant 0 : index
    %303 = vector.load %arg6[%c0_67, %c0_68] : memref<32x8xf32, #tpu.memory_space<vmem>>, vector<32x8xf32>
    %cst_69 = arith.constant dense<0.000000e+00> : vector<8x8xf32>
    %304 = tpu.matmul %301, %303, %cst_69 {dimension_numbers = #tpu.dot_dimension_numbers<[1], [0], [0], [1], [0, 0, 1, 1], [], []>} : vector<8x32xf32>, vector<32x8xf32>, vector<8x8xf32> -> vector<8x8xf32>
    %c0_70 = arith.constant 0 : index
    %c0_71 = arith.constant 0 : index
    %305 = vector.load %arg7[%c0_70, %c0_71] : memref<32x8xf32, #tpu.memory_space<vmem>>, vector<32x8xf32>
    %cst_72 = arith.constant dense<0.000000e+00> : vector<8x8xf32>
    %306 = tpu.matmul %302, %305, %cst_72 {dimension_numbers = #tpu.dot_dimension_numbers<[1], [0], [0], [1], [0, 0, 1, 1], [], []>} : vector<8x32xf32>, vector<32x8xf32>, vector<8x8xf32> -> vector<8x8xf32>
    %307 = arith.addf %304, %306 : vector<8x8xf32>
    %c0_73 = arith.constant 0 : index
    %c0_74 = arith.constant 0 : index
    %308 = vector.load %arg8[%c0_73, %c0_74] : memref<1x8xf32, #tpu.memory_space<vmem>>, vector<1x8xf32>
    %309 = vector.broadcast %308 : vector<1x8xf32> to vector<8x8xf32>
    %310 = arith.addf %307, %309 : vector<8x8xf32>
    %cst_75 = arith.constant dense<0xFF800000> : vector<8xf32>
    %311 = vector.multi_reduction <maximumf>, %310, %cst_75 [1] : vector<8x8xf32> to vector<8xf32>
    %312 = vector.shape_cast %311 : vector<8xf32> to vector<8x1xf32>
    %313 = vector.broadcast %312 : vector<8x1xf32> to vector<8x8xf32>
    %314 = arith.subf %310, %313 : vector<8x8xf32>
    %315 = math.exp %314 : vector<8x8xf32>
    %cst_76 = arith.constant dense<0.000000e+00> : vector<8xf32>
    %316 = vector.multi_reduction <add>, %315, %cst_76 [1] : vector<8x8xf32> to vector<8xf32>
    %317 = vector.shape_cast %316 : vector<8xf32> to vector<8x1xf32>
    %318 = math.log %317 : vector<8x1xf32>
    %319 = vector.broadcast %318 : vector<8x1xf32> to vector<8x8xf32>
    %320 = arith.subf %314, %319 : vector<8x8xf32>
    %c0_77 = arith.constant 0 : index
    %c0_78 = arith.constant 0 : index
    %321 = vector.load %arg9[%c0_77, %c0_78] : memref<8x8xf32, #tpu.memory_space<vmem>>, vector<8x8xf32>
    tpu.vector_store %arg9[%c0_77, %c0_78], %320 {strides = array<i32>} : memref<8x8xf32, #tpu.memory_space<vmem>>, vector<8x8xf32>,
    return
  }
}

</mosaic_0001>

<llo_original>
// kernel: lstm_tagger_forward.1
$region0: #{lstm_tagger_forward.1}
  #allocation0 [shape = 'u32[]', space=smem, size = 0x4, offset = 0x4, fixed_abs, tag = 'smem constant byte address 0x4 - core index']
  #allocation1 [shape = 'u32[72,128]{1,0:T(1,128)}', space=vmem, size = 0x9000, scoped, tag = 'internal scratch']
  %s0 = inlined_call_operand.vmem [shape: s32[8], index: 0, kind: input, shape index: {}]
  %s1 = inlined_call_operand.hbm [shape: f32[16,32], index: 1, kind: input, shape index: {}]
  %s2 = inlined_call_operand.vmem [shape: f32[32,256], index: 2, kind: input, shape index: {}]
  %s3 = inlined_call_operand.hbm [shape: f32[32,256], index: 3, kind: input, shape index: {}]
  %s4 = inlined_call_operand.hbm [shape: f32[64,256], index: 4, kind: input, shape index: {}]
  %s5 = inlined_call_operand.vmem [shape: f32[1,256], index: 5, kind: input, shape index: {}]
  %s6 = inlined_call_operand.vmem [shape: f32[32,8], index: 6, kind: input, shape index: {}]
  %s7 = inlined_call_operand.vmem [shape: f32[32,8], index: 7, kind: input, shape index: {}]
  %s8 = inlined_call_operand.vmem [shape: f32[1,8], index: 8, kind: input, shape index: {}]
  %s9 = inlined_call_operand.hbm [shape: f32[8,8], index: 9, kind: output, shape index: {}]
  %s10 = sld [smem:[#allocation0]]
  $region62: #{lstm_tagger_forward.1} parent=0
    _
  %s12 = ssub.s32 1, %s10
  %s13 = scalar_select 0, %s12, %s10
  $region1: #{lstm_tagger_forward.1} parent=0
    #allocation2 [shape = 'u8[512]{0}', space=smem, size = 0x200, scoped, tag = 'input window, operand 0, single buffered']
    #allocation3 [shape = 's32[1]{0}', space=sflag, size = 0x4, scoped, tag = 'scoped memory for lstm_tagger_forward.1']
    #allocation4 [shape = 's32[1]{0}', space=sflag, size = 0x4, scoped, tag = 'scoped memory for lstm_tagger_forward.1']
    #allocation5 [shape = 's32[1]{0}', space=sflag, size = 0x4, scoped, tag = 'scoped memory for lstm_tagger_forward.1']
    #allocation6 [shape = 'u8[8192]{0}', space=vmem, size = 0x2000, scoped, tag = 'input window, operand 1, single buffered']
    #allocation7 [shape = 'u8[32768]{0}', space=vmem, size = 0x8000, scoped, tag = 'input window, operand 3, single buffered']
    #allocation8 [shape = 's32[1]{0}', space=sflag, size = 0x4, scoped, tag = 'scoped memory for lstm_tagger_forward.1']
    #allocation9 [shape = 'u8[65536]{0}', space=vmem, size = 0x10000, scoped, tag = 'input window, operand 4, single buffered']
    #allocation10 [shape = 'u8[4096]{0}', space=vmem, size = 0x1000, scoped, tag = 'output window, operand 0, single buffered']
    %14 = vsyncpa [#allocation5], 0
    %15 = vsyncpa [#allocation3], 0
    %16 = vsyncpa [#allocation8], 0
    %17 = vsyncpa [#allocation4], 0
    // Predicated region
    $region2: #{lstm_tagger_forward.1} parent=1 // pred_check
      _
    $region3: #{lstm_tagger_forward.1} parent=1 // pred_check_branch
      %19 = sbr.rel (0) target = $region5
    $region4: #{lstm_tagger_forward.1} parent=1 // pred_region
      %21 = vsyncadd [#allocation5], 0
      %s23 = sshll.u32 %s0, 4
      %s24 = int_to_ptr.vmem [resolvable:$true] %s23
      %26 = dma.vmem_to_smem %s24, 16, [#allocation2], [#allocation5]
    $region5: #{lstm_tagger_forward.1} parent=1 // pred_fallthru
      _
    // Predicated region
    $region6: #{lstm_tagger_forward.1} parent=1 // pred_check
      _
    $region7: #{lstm_tagger_forward.1} parent=1 // pred_check_branch
      %28 = sbr.rel (0) target = $region9
    $region8: #{lstm_tagger_forward.1} parent=1 // pred_region
      %30 = vsyncadd [#allocation3], 0
      %s31 = sshll.u32 %s1, 4
      %s32 = int_to_ptr.hbm [resolvable:$true] %s31
      %s33 = sshll.u32 [#allocation6], 4
      %s34 = int_to_ptr.vmem [resolvable:$true] %s33
      %39 = dma.hbm_to_vmem [thread:$0]  %s32, 256, %s34, [#allocation3], 128, 128, 8
    $region9: #{lstm_tagger_forward.1} parent=1 // pred_fallthru
      _
    // Predicated region
    $region10: #{lstm_tagger_forward.1} parent=1 // pred_check
      _
    $region11: #{lstm_tagger_forward.1} parent=1 // pred_check_branch
      %41 = sbr.rel (0) target = $region13
    $region12: #{lstm_tagger_forward.1} parent=1 // pred_region
      _
    $region13: #{lstm_tagger_forward.1} parent=1 // pred_fallthru
      _
    // Predicated region
    $region14: #{lstm_tagger_forward.1} parent=1 // pred_check
      _
    $region15: #{lstm_tagger_forward.1} parent=1 // pred_check_branch
      %43 = sbr.rel (0) target = $region17
    $region16: #{lstm_tagger_forward.1} parent=1 // pred_region
      %45 = vsyncadd [#allocation8], 0
      %s46 = sshll.u32 %s3, 4
      %s47 = int_to_ptr.hbm [resolvable:$true] %s46
      %s48 = sshll.u32 [#allocation7], 4
      %s49 = int_to_ptr.vmem [resolvable:$true] %s48
      %54 = dma.hbm_to_vmem [thread:$0]  %s47, 1024, %s49, [#allocation8], 256, 256, 16
    $region17: #{lstm_tagger_forward.1} parent=1 // pred_fallthru
      _
    // Predicated region
    $region18: #{lstm_tagger_forward.1} parent=1 // pred_check
      _
    $region19: #{lstm_tagger_forward.1} parent=1 // pred_check_branch
      %56 = sbr.rel (0) target = $region21
    $region20: #{lstm_tagger_forward.1} parent=1 // pred_region
      %58 = vsyncadd [#allocation8], 0
      %s59 = sshll.u32 %s4, 4
      %s60 = int_to_ptr.hbm [resolvable:$true] %s59
      %s61 = sshll.u32 [#allocation9], 4
      %s62 = int_to_ptr.vmem [resolvable:$true] %s61
      %67 = dma.hbm_to_vmem [thread:$0]  %s60, 2048, %s62, [#allocation8], 256, 256, 16
    $region21: #{lstm_tagger_forward.1} parent=1 // pred_fallthru
      _
    // Predicated region
    $region22: #{lstm_tagger_forward.1} parent=1 // pred_check
      _
    $region23: #{lstm_tagger_forward.1} parent=1 // pred_check_branch
      %69 = sbr.rel (0) target = $region25
    $region24: #{lstm_tagger_forward.1} parent=1 // pred_region
      _
    $region25: #{lstm_tagger_forward.1} parent=1 // pred_fallthru
      _
    // Predicated region
    $region26: #{lstm_tagger_forward.1} parent=1 // pred_check
      _
    $region27: #{lstm_tagger_forward.1} parent=1 // pred_check_branch
      %71 = sbr.rel (0) target = $region29
    $region28: #{lstm_tagger_forward.1} parent=1 // pred_region
      _
    $region29: #{lstm_tagger_forward.1} parent=1 // pred_fallthru
      _
    // Predicated region
    $region30: #{lstm_tagger_forward.1} parent=1 // pred_check
      _
    $region31: #{lstm_tagger_forward.1} parent=1 // pred_check_branch
      %73 = sbr.rel (0) target = $region33
    $region32: #{lstm_tagger_forward.1} parent=1 // pred_region
      _
    $region33: #{lstm_tagger_forward.1} parent=1 // pred_fallthru
      _
    // Predicated region
    $region34: #{lstm_tagger_forward.1} parent=1 // pred_check
      _
    $region35: #{lstm_tagger_forward.1} parent=1 // pred_check_branch
      %75 = sbr.rel (0) target = $region37
    $region36: #{lstm_tagger_forward.1} parent=1 // pred_region
      _
    $region37: #{lstm_tagger_forward.1} parent=1 // pred_fallthru
      _
    // Predicated region
    $region38: #{lstm_tagger_forward.1} parent=1 // pred_check
      _
    $region39: #{lstm_tagger_forward.1} parent=1 // pred_check_branch
      %77 = sbr.rel (0) target = $region41
    $region40: #{lstm_tagger_forward.1} parent=1 // pred_region
      %79 = dma.done [#allocation5], 16
    $region41: #{lstm_tagger_forward.1} parent=1 // pred_fallthru
      _
    // Predicated region
    $region42: #{lstm_tagger_forward.1} parent=1 // pred_check
      _
    $region43: #{lstm_tagger_forward.1} parent=1 // pred_check_branch
      %81 = sbr.rel (0) target = $region45
    $region44: #{lstm_tagger_forward.1} parent=1 // pred_region
      %83 = dma.done [#allocation3], 256
    $region45: #{lstm_tagger_forward.1} parent=1 // pred_fallthru
      _
    // Predicated region
    $region46: #{lstm_tagger_forward.1} parent=1 // pred_check
      _
    $region47: #{lstm_tagger_forward.1} parent=1 // pred_check_branch
      %85 = sbr.rel (0) target = $region49
    $region48: #{lstm_tagger_forward.1} parent=1 // pred_region
      %87 = dma.done [#allocation8], 1024
    $region49: #{lstm_tagger_forward.1} parent=1 // pred_fallthru
      _
    // Predicated region
    $region50: #{lstm_tagger_forward.1} parent=1 // pred_check
      _
    $region51: #{lstm_tagger_forward.1} parent=1 // pred_check_branch
      %89 = sbr.rel (0) target = $region53
    $region52: #{lstm_tagger_forward.1} parent=1 // pred_region
      %91 = dma.done [#allocation8], 2048
    $region53: #{lstm_tagger_forward.1} parent=1 // pred_fallthru
      _
    %92 = sfence
    %v93 = vld [vmem:[%s2] sm:$0xff]
    %v94 = vld [vmem:[%s2 + $0x8] sm:$0xff]
    %v95 = vld [vmem:[%s2 + $0x10] sm:$0xff]
    %v96 = vld [vmem:[%s2 + $0x18] sm:$0xff]
    %v97 = vld [vmem:[%s2 + $0x20] sm:$0xff]
    %v98 = vld [vmem:[%s2 + $0x28] sm:$0xff]
    %v99 = vld [vmem:[%s2 + $0x30] sm:$0xff]
    %v100 = vld [vmem:[%s2 + $0x38] sm:$0xff]
    %v101 = vld [vmem:[#allocation7] sm:$0xff]
    %v102 = vld [vmem:[#allocation7 + $0x8] sm:$0xff]
    %v103 = vld [vmem:[#allocation7 + $0x10] sm:$0xff]
    %v104 = vld [vmem:[#allocation7 + $0x18] sm:$0xff]
    %v105 = vld [vmem:[#allocation7 + $0x20] sm:$0xff]
    %v106 = vld [vmem:[#allocation7 + $0x28] sm:$0xff]
    %v107 = vld [vmem:[#allocation7 + $0x30] sm:$0xff]
    %v108 = vld [vmem:[#allocation7 + $0x38] sm:$0xff]
    %v109 = vld [vmem:[#allocation9] sm:$0xff]
    %v110 = vld [vmem:[#allocation9 + $0x8] sm:$0xff]
    %v111 = vld [vmem:[#allocation9 + $0x10] sm:$0xff]
    %v112 = vld [vmem:[#allocation9 + $0x18] sm:$0xff]
    %v113 = vld [vmem:[#allocation9 + $0x20] sm:$0xff]
    %v114 = vld [vmem:[#allocation9 + $0x28] sm:$0xff]
    %v115 = vld [vmem:[#allocation9 + $0x30] sm:$0xff]
    %v116 = vld [vmem:[#allocation9 + $0x38] sm:$0xff]
    %v117 = vld [vmem:[#allocation9 + $0x40] sm:$0xff]
    %v118 = vld [vmem:[#allocation9 + $0x48] sm:$0xff]
    %v119 = vld [vmem:[#allocation9 + $0x50] sm:$0xff]
    %v120 = vld [vmem:[#allocation9 + $0x58] sm:$0xff]
    %v121 = vld [vmem:[#allocation9 + $0x60] sm:$0xff]
    %v122 = vld [vmem:[#allocation9 + $0x68] sm:$0xff]
    %v123 = vld [vmem:[#allocation9 + $0x70] sm:$0xff]
    %v124 = vld [vmem:[#allocation9 + $0x78] sm:$0xff]
    %v125 = vld [vmem:[%s5] sm:$0x3]
    %s126 = sld [smem:[#allocation2]]
    %s127 = scalar_lea.vmem [#allocation6], %s126
    %v128 = vld [vmem:[%s127] sm:$0x1]
    %s129 = sld [smem:[#allocation2 + $0x7]]
    %s130 = scalar_lea.vmem [#allocation6], %s129
    %v131 = vld [vmem:[%s130] sm:$0x1]
    %s132 = sld [smem:[#allocation2 + $0x1]]
    %s133 = scalar_lea.vmem [#allocation6], %s132
    %v134 = vld [vmem:[%s133] sm:$0x1]
    %s135 = sld [smem:[#allocation2 + $0x6]]
    %s136 = scalar_lea.vmem [#allocation6], %s135
    %v137 = vld [vmem:[%s136] sm:$0x1]
    %s138 = sld [smem:[#allocation2 + $0x2]]
    %s139 = scalar_lea.vmem [#allocation6], %s138
    %v140 = vld [vmem:[%s139] sm:$0x1]
    %s141 = sld [smem:[#allocation2 + $0x5]]
    %s142 = scalar_lea.vmem [#allocation6], %s141
    %v143 = vld [vmem:[%s142] sm:$0x1]
    %s144 = sld [smem:[#allocation2 + $0x3]]
    %s145 = scalar_lea.vmem [#allocation6], %s144
    %v146 = vld [vmem:[%s145] sm:$0x1]
    %s147 = sld [smem:[#allocation2 + $0x4]]
    %s148 = scalar_lea.vmem [#allocation6], %s147
    %v149 = vld [vmem:[%s148] sm:$0x1]
    %v151 = vrot.slane %v134, 7
    %v154 = vrot.slane %v140, 6
    %v157 = vrot.slane %v146, 5
    %v160 = vrot.slane %v149, 4
    %v163 = vrot.slane %v143, 3
    %v166 = vrot.slane %v137, 2
    %v169 = vrot.slane %v131, 1
    %vm171 = vcmask 1040384
    %v172 = vsel %vm171, %v128, %v151
    %vm173 = vcmask 1041408
    %v174 = vsel %vm173, %v172, %v154
    %vm175 = vcmask 1042432
    %v176 = vsel %vm175, %v174, %v157
    %vm177 = vcmask 1043456
    %v178 = vsel %vm177, %v176, %v160
    %vm179 = vcmask 1044480
    %v180 = vsel %vm179, %v178, %v163
    %vm181 = vcmask 1045504
    %v182 = vsel %vm181, %v180, %v166
    %vm183 = vcmask 1046528
    %v184 = vsel %vm183, %v182, %v169
    %v185 = vrot.slane %v137, 7
    %v187 = vrot.slane %v143, 6
    %v189 = vrot.slane %v149, 5
    %v191 = vrot.slane %v146, 4
    %v193 = vrot.slane %v140, 3
    %v195 = vrot.slane %v134, 2
    %v198 = vrot.slane %v128, 1
    %v200 = vsel %vm171, %v131, %v185
    %v201 = vsel %vm173, %v200, %v187
    %v202 = vsel %vm175, %v201, %v189
    %v203 = vsel %vm177, %v202, %v191
    %v204 = vsel %vm179, %v203, %v193
    %v205 = vsel %vm181, %v204, %v195
    %v206 = vsel %vm183, %v205, %v198
    %vm207 = vcmask 261120
    %v209 = vsel %vm207, %v206, 0
    %211 = vmatpush.msra.mxu0 0.0
    %212 = vmatpush.msra.mxu0 0.0
    %213 = vmatpush.msra.mxu0 0.0
    %214 = vmatpush.msra.mxu0 0.0
    %215 = vmatpush.msra.mxu0 0.0
    %216 = vmatpush.msra.mxu0 0.0
    %217 = vmatpush.msra.mxu0 0.0
    %218 = vmatpush.msra.mxu0 0.0
    %219 = vmatpush.msra.mxu0 0.0
    %220 = vmatpush.msra.mxu0 0.0
    %221 = vmatpush.msra.mxu0 0.0
    %222 = vmatpush.msra.mxu0 0.0
    %223 = vmatpush.msra.mxu0 %v107
    %224 = vmatpush.msra.mxu0 %v105
    %225 = vmatpush.msra.mxu0 %v103
    %226 = vmatpush.msra.mxu0 %v101
    %227 = vmatmul.f32.gmra.mxu0 %v209
    %v228 = vpop.f32.mrf.mxu0
    %v229 = vadd.f32 0.0, %v228
    %230 = vdwg.mxu0
    %231 = vmatpush.msra.mxu0 0.0
    %232 = vmatpush.msra.mxu0 0.0
    %233 = vmatpush.msra.mxu0 0.0
    %234 = vmatpush.msra.mxu0 0.0
    %235 = vmatpush.msra.mxu0 0.0
    %236 = vmatpush.msra.mxu0 0.0
    %237 = vmatpush.msra.mxu0 0.0
    %238 = vmatpush.msra.mxu0 0.0
    %239 = vmatpush.msra.mxu0 0.0
    %240 = vmatpush.msra.mxu0 0.0
    %241 = vmatpush.msra.mxu0 0.0
    %242 = vmatpush.msra.mxu0 0.0
    %243 = vmatpush.msra.mxu0 %v108
    %244 = vmatpush.msra.mxu0 %v106
    %245 = vmatpush.msra.mxu0 %v104
    %246 = vmatpush.msra.mxu0 %v102
    %247 = vmatmul.f32.gmra.mxu0 %v209
    %v248 = vpop.f32.mrf.mxu0
    %v249 = vadd.f32 0.0, %v248
    %250 = vdwg.mxu0
    %v252 = vsel %vm207, %v184, 0
    %254 = vmatpush.msra.mxu0 0.0
    %255 = vmatpush.msra.mxu0 0.0
    %256 = vmatpush.msra.mxu0 0.0
    %257 = vmatpush.msra.mxu0 0.0
    %258 = vmatpush.msra.mxu0 0.0
    %259 = vmatpush.msra.mxu0 0.0
    %260 = vmatpush.msra.mxu0 0.0
    %261 = vmatpush.msra.mxu0 0.0
    %262 = vmatpush.msra.mxu0 0.0
    %263 = vmatpush.msra.mxu0 0.0
    %264 = vmatpush.msra.mxu0 0.0
    %265 = vmatpush.msra.mxu0 0.0
    %266 = vmatpush.msra.mxu0 %v99
    %267 = vmatpush.msra.mxu0 %v97
    %268 = vmatpush.msra.mxu0 %v95
    %269 = vmatpush.msra.mxu0 %v93
    %270 = vmatmul.f32.gmra.mxu0 %v252
    %v271 = vpop.f32.mrf.mxu0
    %v272 = vadd.f32 %v229, %v271
    %273 = vdwg.mxu0
    %274 = vmatpush.msra.mxu0 0.0
    %275 = vmatpush.msra.mxu0 0.0
    %276 = vmatpush.msra.mxu0 0.0
    %277 = vmatpush.msra.mxu0 0.0
    %278 = vmatpush.msra.mxu0 0.0
    %279 = vmatpush.msra.mxu0 0.0
    %280 = vmatpush.msra.mxu0 0.0
    %281 = vmatpush.msra.mxu0 0.0
    %282 = vmatpush.msra.mxu0 0.0
    %283 = vmatpush.msra.mxu0 0.0
    %284 = vmatpush.msra.mxu0 0.0
    %285 = vmatpush.msra.mxu0 0.0
    %286 = vmatpush.msra.mxu0 %v100
    %287 = vmatpush.msra.mxu0 %v98
    %288 = vmatpush.msra.mxu0 %v96
    %289 = vmatpush.msra.mxu0 %v94
    %290 = vmatmul.f32.gmra.mxu0 %v252
    %v291 = vpop.f32.mrf.mxu0
    %v292 = vadd.f32 %v249, %v291
    %293 = vdwg.mxu0
    %v295 = vperm.slane %v125, 0
    %v296 = vperm.slane %v125, 1
    %v299 = vadd.f32 %v272, %v295
    %v300 = vadd.f32 %v292, %v296
    %vm301 = vcmask 523264
    %v303 = vsel %vm301, 0.0, 0
    %305 = vmatpush.msra.mxu0 0.0
    %306 = vmatpush.msra.mxu0 0.0
    %307 = vmatpush.msra.mxu0 0.0
    %308 = vmatpush.msra.mxu0 0.0
    %309 = vmatpush.msra.mxu0 0.0
    %310 = vmatpush.msra.mxu0 0.0
    %311 = vmatpush.msra.mxu0 0.0
    %312 = vmatpush.msra.mxu0 0.0
    %313 = vmatpush.msra.mxu0 %v123
    %314 = vmatpush.msra.mxu0 %v121
    %315 = vmatpush.msra.mxu0 %v119
    %316 = vmatpush.msra.mxu0 %v117
    %317 = vmatpush.msra.mxu0 %v115
    %318 = vmatpush.msra.mxu0 %v113
    %319 = vmatpush.msra.mxu0 %v111
    %320 = vmatpush.msra.mxu0 %v109
    %321 = vmatmul.f32.gmra.mxu0 %v303
    %v322 = vpop.f32.mrf.mxu0
    %v323 = vadd.f32 0.0, %v322
    %324 = vdwg.mxu0
    %325 = vmatpush.msra.mxu0 0.0
    %326 = vmatpush.msra.mxu0 0.0
    %327 = vmatpush.msra.mxu0 0.0
    %328 = vmatpush.msra.mxu0 0.0
    %329 = vmatpush.msra.mxu0 0.0
    %330 = vmatpush.msra.mxu0 0.0
    %331 = vmatpush.msra.mxu0 0.0
    %332 = vmatpush.msra.mxu0 0.0
    %333 = vmatpush.msra.mxu0 %v124
    %334 = vmatpush.msra.mxu0 %v122
    %335 = vmatpush.msra.mxu0 %v120
    %336 = vmatpush.msra.mxu0 %v118
    %337 = vmatpush.msra.mxu0 %v116
    %338 = vmatpush.msra.mxu0 %v114
    %339 = vmatpush.msra.mxu0 %v112
    %340 = vmatpush.msra.mxu0 %v110
    %341 = vmatmul.f32.gmra.mxu0 %v303
    %v342 = vpop.f32.mrf.mxu0
    %v343 = vadd.f32 0.0, %v342
    %344 = vdwg.mxu0
    %v345 = vadd.f32 %v299, %v323
    %v346 = vadd.f32 %v300, %v343
    %v347 = vxor.u32 %v345, 2147483648
    %v348 = vmul.f32 %v347, 1.442695
    %v349 = vpow.pop %v348
    %v350 = vadd.f32 %v349, 1.0
    %v351 = vrcp.pop %v350
    %v352 = vmul.f32 %v350, %v351
    %v353 = vsub.f32 1.0, %v352
    %v354 = vmul.f32 %v351, %v353
    %v355 = vadd.f32 %v351, %v354
    %vm356 = vweird.f32 %v350
    %vm357 = vweird.f32 %v351
    %vm358 = vmor %vm356, %vm357
    %v359 = vsel %vm358, %v351, %v355
    %v360 = vand.u32 2147483647, %v350
    %vm361 = vcmp.eq.f32.partialorder %v360, 8.507059e+37
    %v362 = vand.u32 %v350, 2147483648
    %v363 = vor.u32 1.1754944e-38, %v362
    %v364 = vsel %vm361, %v363, %v359
    %v365 = vmul.f32 1.0, %v364
    %v366 = vtanh.pop %v346
    %v367 = vxor.u32 %v346, 2147483648
    %v368 = vmul.f32 %v367, 1.442695
    %v369 = vpow.pop %v368
    %v370 = vadd.f32 %v369, 1.0
    %v371 = vrcp.pop %v370
    %v372 = vmul.f32 %v370, %v371
    %v373 = vsub.f32 1.0, %v372
    %v374 = vmul.f32 %v371, %v373
    %v375 = vadd.f32 %v371, %v374
    %vm376 = vweird.f32 %v370
    %vm377 = vweird.f32 %v371
    %vm378 = vmor %vm376, %vm377
    %v379 = vsel %vm378, %v371, %v375
    %v380 = vand.u32 2147483647, %v370
    %vm381 = vcmp.eq.f32.partialorder %v380, 8.507059e+37
    %v382 = vand.u32 %v370, 2147483648
    %v383 = vor.u32 1.1754944e-38, %v382
    %v384 = vsel %vm381, %v383, %v379
    %v385 = vmul.f32 1.0, %v384
    %v386 = vmul.f32 %v365, 0.0
    %v387 = vmul.f32 %v365, %v366
    %389 = vrot.lane.b32.xlu0 %v387, 64
    %v390 = vpop.permute.xlu0 %389
    %v392 = vadd.f32 %v386, %v390
    %v393 = vtanh.pop %v392
    %v394 = vmul.f32 %v385, %v393
    %396 = vrot.lane.b32.xlu0 %v394, 64
    %v397 = vpop.permute.xlu0 %396
    %v398 = vsel %vm301, %v397, 0
    %400 = vmatpush.msra.mxu0 0.0
    %401 = vmatpush.msra.mxu0 0.0
    %402 = vmatpush.msra.mxu0 0.0
    %403 = vmatpush.msra.mxu0 0.0
    %404 = vmatpush.msra.mxu0 0.0
    %405 = vmatpush.msra.mxu0 0.0
    %406 = vmatpush.msra.mxu0 0.0
    %407 = vmatpush.msra.mxu0 0.0
    %408 = vmatpush.msra.mxu0 %v123
    %409 = vmatpush.msra.mxu0 %v121
    %410 = vmatpush.msra.mxu0 %v119
    %411 = vmatpush.msra.mxu0 %v117
    %412 = vmatpush.msra.mxu0 %v115
    %413 = vmatpush.msra.mxu0 %v113
    %414 = vmatpush.msra.mxu0 %v111
    %415 = vmatpush.msra.mxu0 %v109
    %416 = vmatmul.f32.gmra.mxu0 %v398
    %v417 = vpop.f32.mrf.mxu0
    %v418 = vadd.f32 0.0, %v417
    %419 = vdwg.mxu0
    %420 = vmatpush.msra.mxu0 0.0
    %421 = vmatpush.msra.mxu0 0.0
    %422 = vmatpush.msra.mxu0 0.0
    %423 = vmatpush.msra.mxu0 0.0
    %424 = vmatpush.msra.mxu0 0.0
    %425 = vmatpush.msra.mxu0 0.0
    %426 = vmatpush.msra.mxu0 0.0
    %427 = vmatpush.msra.mxu0 0.0
    %428 = vmatpush.msra.mxu0 %v124
    %429 = vmatpush.msra.mxu0 %v122
    %430 = vmatpush.msra.mxu0 %v120
    %431 = vmatpush.msra.mxu0 %v118
    %432 = vmatpush.msra.mxu0 %v116
    %433 = vmatpush.msra.mxu0 %v114
    %434 = vmatpush.msra.mxu0 %v112
    %435 = vmatpush.msra.mxu0 %v110
    %436 = vmatmul.f32.gmra.mxu0 %v398
    %v437 = vpop.f32.mrf.mxu0
    %v438 = vadd.f32 0.0, %v437
    %439 = vdwg.mxu0
    %v442 = vrot.slane %v418, 7
    %v443 = vrot.slane %v438, 7
    %v446 = vadd.f32 %v299, %v442
    %v447 = vadd.f32 %v300, %v443
    %v448 = vxor.u32 %v446, 2147483648
    %v449 = vmul.f32 %v448, 1.442695
    %v450 = vpow.pop %v449
    %v451 = vadd.f32 %v450, 1.0
    %v452 = vrcp.pop %v451
    %v453 = vmul.f32 %v451, %v452
    %v454 = vsub.f32 1.0, %v453
    %v455 = vmul.f32 %v452, %v454
    %v456 = vadd.f32 %v452, %v455
    %vm457 = vweird.f32 %v451
    %vm458 = vweird.f32 %v452
    %vm459 = vmor %vm457, %vm458
    %v460 = vsel %vm459, %v452, %v456
    %v461 = vand.u32 2147483647, %v451
    %vm462 = vcmp.eq.f32.partialorder %v461, 8.507059e+37
    %v463 = vand.u32 %v451, 2147483648
    %v464 = vor.u32 1.1754944e-38, %v463
    %v465 = vsel %vm462, %v464, %v460
    %v466 = vmul.f32 1.0, %v465
    %v467 = vtanh.pop %v447
    %v468 = vxor.u32 %v447, 2147483648
    %v469 = vmul.f32 %v468, 1.442695
    %v470 = vpow.pop %v469
    %v471 = vadd.f32 %v470, 1.0
    %v472 = vrcp.pop %v471
    %v473 = vmul.f32 %v471, %v472
    %v474 = vsub.f32 1.0, %v473
    %v475 = vmul.f32 %v472, %v474
    %v476 = vadd.f32 %v472, %v475
    %vm477 = vweird.f32 %v471
    %vm478 = vweird.f32 %v472
    %vm479 = vmor %vm477, %vm478
    %v480 = vsel %vm479, %v472, %v476
    %v481 = vand.u32 2147483647, %v471
    %vm482 = vcmp.eq.f32.partialorder %v481, 8.507059e+37
    %v483 = vand.u32 %v471, 2147483648
    %v484 = vor.u32 1.1754944e-38, %v483
    %v485 = vsel %vm482, %v484, %v480
    %v486 = vmul.f32 1.0, %v485
    %v488 = vrot.slane %v392, 7
    %v490 = vmul.f32 %v466, %v488
    %v491 = vmul.f32 %v466, %v467
    %493 = vrot.lane.b32.xlu0 %v491, 64
    %v494 = vpop.permute.xlu0 %493
    %v496 = vadd.f32 %v490, %v494
    %v497 = vtanh.pop %v496
    %v498 = vmul.f32 %v486, %v497
    %v500 = vrot.slane %v498, 1
    %501 = vrot.lane.b32.xlu0 %v500, 64
    %v502 = vpop.permute.xlu0 %501
    %v503 = vsel %vm301, %v502, 0
    %505 = vmatpush.msra.mxu0 0.0
    %506 = vmatpush.msra.mxu0 0.0
    %507 = vmatpush.msra.mxu0 0.0
    %508 = vmatpush.msra.mxu0 0.0
    %509 = vmatpush.msra.mxu0 0.0
    %510 = vmatpush.msra.mxu0 0.0
    %511 = vmatpush.msra.mxu0 0.0
    %512 = vmatpush.msra.mxu0 0.0
    %513 = vmatpush.msra.mxu0 %v123
    %514 = vmatpush.msra.mxu0 %v121
    %515 = vmatpush.msra.mxu0 %v119
    %516 = vmatpush.msra.mxu0 %v117
    %517 = vmatpush.msra.mxu0 %v115
    %518 = vmatpush.msra.mxu0 %v113
    %519 = vmatpush.msra.mxu0 %v111
    %520 = vmatpush.msra.mxu0 %v109
    %521 = vmatmul.f32.gmra.mxu0 %v503
    %v522 = vpop.f32.mrf.mxu0
    %v523 = vadd.f32 0.0, %v522
    %524 = vdwg.mxu0
    %525 = vmatpush.msra.mxu0 0.0
    %526 = vmatpush.msra.mxu0 0.0
    %527 = vmatpush.msra.mxu0 0.0
    %528 = vmatpush.msra.mxu0 0.0
    %529 = vmatpush.msra.mxu0 0.0
    %530 = vmatpush.msra.mxu0 0.0
    %531 = vmatpush.msra.mxu0 0.0
    %532 = vmatpush.msra.mxu0 0.0
    %533 = vmatpush.msra.mxu0 %v124
    %534 = vmatpush.msra.mxu0 %v122
    %535 = vmatpush.msra.mxu0 %v120
    %536 = vmatpush.msra.mxu0 %v118
    %537 = vmatpush.msra.mxu0 %v116
    %538 = vmatpush.msra.mxu0 %v114
    %539 = vmatpush.msra.mxu0 %v112
    %540 = vmatpush.msra.mxu0 %v110
    %541 = vmatmul.f32.gmra.mxu0 %v503
    %v542 = vpop.f32.mrf.mxu0
    %v543 = vadd.f32 0.0, %v542
    %544 = vdwg.mxu0
    %v547 = vrot.slane %v523, 6
    %v548 = vrot.slane %v543, 6
    %v551 = vadd.f32 %v299, %v547
    %v552 = vadd.f32 %v300, %v548
    %v553 = vxor.u32 %v551, 2147483648
    %v554 = vmul.f32 %v553, 1.442695
    %v555 = vpow.pop %v554
    %v556 = vadd.f32 %v555, 1.0
    %v557 = vrcp.pop %v556
    %v558 = vmul.f32 %v556, %v557
    %v559 = vsub.f32 1.0, %v558
    %v560 = vmul.f32 %v557, %v559
    %v561 = vadd.f32 %v557, %v560
    %vm562 = vweird.f32 %v556
    %vm563 = vweird.f32 %v557
    %vm564 = vmor %vm562, %vm563
    %v565 = vsel %vm564, %v557, %v561
    %v566 = vand.u32 2147483647, %v556
    %vm567 = vcmp.eq.f32.partialorder %v566, 8.507059e+37
    %v568 = vand.u32 %v556, 2147483648
    %v569 = vor.u32 1.1754944e-38, %v568
    %v570 = vsel %vm567, %v569, %v565
    %v571 = vmul.f32 1.0, %v570
    %v572 = vtanh.pop %v552
    %v573 = vxor.u32 %v552, 2147483648
    %v574 = vmul.f32 %v573, 1.442695
    %v575 = vpow.pop %v574
    %v576 = vadd.f32 %v575, 1.0
    %v577 = vrcp.pop %v576
    %v578 = vmul.f32 %v576, %v577
    %v579 = vsub.f32 1.0, %v578
    %v580 = vmul.f32 %v577, %v579
    %v581 = vadd.f32 %v577, %v580
    %vm582 = vweird.f32 %v576
    %vm583 = vweird.f32 %v577
    %vm584 = vmor %vm582, %vm583
    %v585 = vsel %vm584, %v577, %v581
    %v586 = vand.u32 2147483647, %v576
    %vm587 = vcmp.eq.f32.partialorder %v586, 8.507059e+37
    %v588 = vand.u32 %v576, 2147483648
    %v589 = vor.u32 1.1754944e-38, %v588
    %v590 = vsel %vm587, %v589, %v585
    %v591 = vmul.f32 1.0, %v590
    %v593 = vrot.slane %v496, 7
    %v595 = vmul.f32 %v571, %v593
    %v596 = vmul.f32 %v571, %v572
    %598 = vrot.lane.b32.xlu0 %v596, 64
    %v599 = vpop.permute.xlu0 %598
    %v601 = vadd.f32 %v595, %v599
    %v602 = vtanh.pop %v601
    %v603 = vmul.f32 %v591, %v602
    %v605 = vrot.slane %v603, 2
    %606 = vrot.lane.b32.xlu0 %v605, 64
    %v607 = vpop.permute.xlu0 %606
    %v608 = vsel %vm301, %v607, 0
    %610 = vmatpush.msra.mxu0 0.0
    %611 = vmatpush.msra.mxu0 0.0
    %612 = vmatpush.msra.mxu0 0.0
    %613 = vmatpush.msra.mxu0 0.0
    %614 = vmatpush.msra.mxu0 0.0
    %615 = vmatpush.msra.mxu0 0.0
    %616 = vmatpush.msra.mxu0 0.0
    %617 = vmatpush.msra.mxu0 0.0
    %618 = vmatpush.msra.mxu0 %v123
    %619 = vmatpush.msra.mxu0 %v121
    %620 = vmatpush.msra.mxu0 %v119
    %621 = vmatpush.msra.mxu0 %v117
    %622 = vmatpush.msra.mxu0 %v115
    %623 = vmatpush.msra.mxu0 %v113
    %624 = vmatpush.msra.mxu0 %v111
    %625 = vmatpush.msra.mxu0 %v109
    %626 = vmatmul.f32.gmra.mxu0 %v608
    %v627 = vpop.f32.mrf.mxu0
    %v628 = vadd.f32 0.0, %v627
    %629 = vdwg.mxu0
    %630 = vmatpush.msra.mxu0 0.0
    %631 = vmatpush.msra.mxu0 0.0
    %632 = vmatpush.msra.mxu0 0.0
    %633 = vmatpush.msra.mxu0 0.0
    %634 = vmatpush.msra.mxu0 0.0
    %635 = vmatpush.msra.mxu0 0.0
    %636 = vmatpush.msra.mxu0 0.0
    %637 = vmatpush.msra.mxu0 0.0
    %638 = vmatpush.msra.mxu0 %v124
    %639 = vmatpush.msra.mxu0 %v122
    %640 = vmatpush.msra.mxu0 %v120
    %641 = vmatpush.msra.mxu0 %v118
    %642 = vmatpush.msra.mxu0 %v116
    %643 = vmatpush.msra.mxu0 %v114
    %644 = vmatpush.msra.mxu0 %v112
    %645 = vmatpush.msra.mxu0 %v110
    %646 = vmatmul.f32.gmra.mxu0 %v608
    %v647 = vpop.f32.mrf.mxu0
    %v648 = vadd.f32 0.0, %v647
    %649 = vdwg.mxu0
    %v652 = vrot.slane %v628, 5
    %v653 = vrot.slane %v648, 5
    %v656 = vadd.f32 %v299, %v652
    %v657 = vadd.f32 %v300, %v653
    %v658 = vxor.u32 %v656, 2147483648
    %v659 = vmul.f32 %v658, 1.442695
    %v660 = vpow.pop %v659
    %v661 = vadd.f32 %v660, 1.0
    %v662 = vrcp.pop %v661
    %v663 = vmul.f32 %v661, %v662
    %v664 = vsub.f32 1.0, %v663
    %v665 = vmul.f32 %v662, %v664
    %v666 = vadd.f32 %v662, %v665
    %vm667 = vweird.f32 %v661
    %vm668 = vweird.f32 %v662
    %vm669 = vmor %vm667, %vm668
    %v670 = vsel %vm669, %v662, %v666
    %v671 = vand.u32 2147483647, %v661
    %vm672 = vcmp.eq.f32.partialorder %v671, 8.507059e+37
    %v673 = vand.u32 %v661, 2147483648
    %v674 = vor.u32 1.1754944e-38, %v673
    %v675 = vsel %vm672, %v674, %v670
    %v676 = vmul.f32 1.0, %v675
    %v677 = vtanh.pop %v657
    %v678 = vxor.u32 %v657, 2147483648
    %v679 = vmul.f32 %v678, 1.442695
    %v680 = vpow.pop %v679
    %v681 = vadd.f32 %v680, 1.0
    %v682 = vrcp.pop %v681
    %v683 = vmul.f32 %v681, %v682
    %v684 = vsub.f32 1.0, %v683
    %v685 = vmul.f32 %v682, %v684
    %v686 = vadd.f32 %v682, %v685
    %vm687 = vweird.f32 %v681
    %vm688 = vweird.f32 %v682
    %vm689 = vmor %vm687, %vm688
    %v690 = vsel %vm689, %v682, %v686
    %v691 = vand.u32 2147483647, %v681
    %vm692 = vcmp.eq.f32.partialorder %v691, 8.507059e+37
    %v693 = vand.u32 %v681, 2147483648
    %v694 = vor.u32 1.1754944e-38, %v693
    %v695 = vsel %vm692, %v694, %v690
    %v696 = vmul.f32 1.0, %v695
    %v698 = vrot.slane %v601, 7
    %v700 = vmul.f32 %v676, %v698
    %v701 = vmul.f32 %v676, %v677
    %703 = vrot.lane.b32.xlu0 %v701, 64
    %v704 = vpop.permute.xlu0 %703
    %v706 = vadd.f32 %v700, %v704
    %v707 = vtanh.pop %v706
    %v708 = vmul.f32 %v696, %v707
    %v710 = vrot.slane %v708, 3
    %711 = vrot.lane.b32.xlu0 %v710, 64
    %v712 = vpop.permute.xlu0 %711
    %v713 = vsel %vm301, %v712, 0
    %715 = vmatpush.msra.mxu0 0.0
    %716 = vmatpush.msra.mxu0 0.0
    %717 = vmatpush.msra.mxu0 0.0
    %718 = vmatpush.msra.mxu0 0.0
    %719 = vmatpush.msra.mxu0 0.0
    %720 = vmatpush.msra.mxu0 0.0
    %721 = vmatpush.msra.mxu0 0.0
    %722 = vmatpush.msra.mxu0 0.0
    %723 = vmatpush.msra.mxu0 %v123
    %724 = vmatpush.msra.mxu0 %v121
    %725 = vmatpush.msra.mxu0 %v119
    %726 = vmatpush.msra.mxu0 %v117
    %727 = vmatpush.msra.mxu0 %v115
    %728 = vmatpush.msra.mxu0 %v113
    %729 = vmatpush.msra.mxu0 %v111
    %730 = vmatpush.msra.mxu0 %v109
    %731 = vmatmul.f32.gmra.mxu0 %v713
    %v732 = vpop.f32.mrf.mxu0
    %v733 = vadd.f32 0.0, %v732
    %734 = vdwg.mxu0
    %735 = vmatpush.msra.mxu0 0.0
    %736 = vmatpush.msra.mxu0 0.0
    %737 = vmatpush.msra.mxu0 0.0
    %738 = vmatpush.msra.mxu0 0.0
    %739 = vmatpush.msra.mxu0 0.0
    %740 = vmatpush.msra.mxu0 0.0
    %741 = vmatpush.msra.mxu0 0.0
    %742 = vmatpush.msra.mxu0 0.0
    %743 = vmatpush.msra.mxu0 %v124
    %744 = vmatpush.msra.mxu0 %v122
    %745 = vmatpush.msra.mxu0 %v120
    %746 = vmatpush.msra.mxu0 %v118
    %747 = vmatpush.msra.mxu0 %v116
    %748 = vmatpush.msra.mxu0 %v114
    %749 = vmatpush.msra.mxu0 %v112
    %750 = vmatpush.msra.mxu0 %v110
    %751 = vmatmul.f32.gmra.mxu0 %v713
    %v752 = vpop.f32.mrf.mxu0
    %v753 = vadd.f32 0.0, %v752
    %754 = vdwg.mxu0
    %v757 = vrot.slane %v733, 4
    %v758 = vrot.slane %v753, 4
    %v761 = vadd.f32 %v299, %v757
    %v762 = vadd.f32 %v300, %v758
    %v763 = vxor.u32 %v761, 2147483648
    %v764 = vmul.f32 %v763, 1.442695
    %v765 = vpow.pop %v764
    %v766 = vadd.f32 %v765, 1.0
    %v767 = vrcp.pop %v766
    %v768 = vmul.f32 %v766, %v767
    %v769 = vsub.f32 1.0, %v768
    %v770 = vmul.f32 %v767, %v769
    %v771 = vadd.f32 %v767, %v770
    %vm772 = vweird.f32 %v766
    %vm773 = vweird.f32 %v767
    %vm774 = vmor %vm772, %vm773
    %v775 = vsel %vm774, %v767, %v771
    %v776 = vand.u32 2147483647, %v766
    %vm777 = vcmp.eq.f32.partialorder %v776, 8.507059e+37
    %v778 = vand.u32 %v766, 2147483648
    %v779 = vor.u32 1.1754944e-38, %v778
    %v780 = vsel %vm777, %v779, %v775
    %v781 = vmul.f32 1.0, %v780
    %v782 = vtanh.pop %v762
    %v783 = vxor.u32 %v762, 2147483648
    %v784 = vmul.f32 %v783, 1.442695
    %v785 = vpow.pop %v784
    %v786 = vadd.f32 %v785, 1.0
    %v787 = vrcp.pop %v786
    %v788 = vmul.f32 %v786, %v787
    %v789 = vsub.f32 1.0, %v788
    %v790 = vmul.f32 %v787, %v789
    %v791 = vadd.f32 %v787, %v790
    %vm792 = vweird.f32 %v786
    %vm793 = vweird.f32 %v787
    %vm794 = vmor %vm792, %vm793
    %v795 = vsel %vm794, %v787, %v791
    %v796 = vand.u32 2147483647, %v786
    %vm797 = vcmp.eq.f32.partialorder %v796, 8.507059e+37
    %v798 = vand.u32 %v786, 2147483648
    %v799 = vor.u32 1.1754944e-38, %v798
    %v800 = vsel %vm797, %v799, %v795
    %v801 = vmul.f32 1.0, %v800
    %v803 = vrot.slane %v706, 7
    %v805 = vmul.f32 %v781, %v803
    %v806 = vmul.f32 %v781, %v782
    %808 = vrot.lane.b32.xlu0 %v806, 64
    %v809 = vpop.permute.xlu0 %808
    %v811 = vadd.f32 %v805, %v809
    %v812 = vtanh.pop %v811
    %v813 = vmul.f32 %v801, %v812
    %v815 = vrot.slane %v813, 4
    %816 = vrot.lane.b32.xlu0 %v815, 64
    %v817 = vpop.permute.xlu0 %816
    %v818 = vsel %vm301, %v817, 0
    %820 = vmatpush.msra.mxu0 0.0
    %821 = vmatpush.msra.mxu0 0.0
    %822 = vmatpush.msra.mxu0 0.0
    %823 = vmatpush.msra.mxu0 0.0
    %824 = vmatpush.msra.mxu0 0.0
    %825 = vmatpush.msra.mxu0 0.0
    %826 = vmatpush.msra.mxu0 0.0
    %827 = vmatpush.msra.mxu0 0.0
    %828 = vmatpush.msra.mxu0 %v123
    %829 = vmatpush.msra.mxu0 %v121
    %830 = vmatpush.msra.mxu0 %v119
    %831 = vmatpush.msra.mxu0 %v117
    %832 = vmatpush.msra.mxu0 %v115
    %833 = vmatpush.msra.mxu0 %v113
    %834 = vmatpush.msra.mxu0 %v111
    %835 = vmatpush.msra.mxu0 %v109
    %836 = vmatmul.f32.gmra.mxu0 %v818
    %v837 = vpop.f32.mrf.mxu0
    %v838 = vadd.f32 0.0, %v837
    %839 = vdwg.mxu0
    %840 = vmatpush.msra.mxu0 0.0
    %841 = vmatpush.msra.mxu0 0.0
    %842 = vmatpush.msra.mxu0 0.0
    %843 = vmatpush.msra.mxu0 0.0
    %844 = vmatpush.msra.mxu0 0.0
    %845 = vmatpush.msra.mxu0 0.0
    %846 = vmatpush.msra.mxu0 0.0
    %847 = vmatpush.msra.mxu0 0.0
    %848 = vmatpush.msra.mxu0 %v124
    %849 = vmatpush.msra.mxu0 %v122
    %850 = vmatpush.msra.mxu0 %v120
    %851 = vmatpush.msra.mxu0 %v118
    %852 = vmatpush.msra.mxu0 %v116
    %853 = vmatpush.msra.mxu0 %v114
    %854 = vmatpush.msra.mxu0 %v112
    %855 = vmatpush.msra.mxu0 %v110
    %856 = vmatmul.f32.gmra.mxu0 %v818
    %v857 = vpop.f32.mrf.mxu0
    %v858 = vadd.f32 0.0, %v857
    %859 = vdwg.mxu0
    %v862 = vrot.slane %v838, 3
    %v863 = vrot.slane %v858, 3
    %v866 = vadd.f32 %v299, %v862
    %v867 = vadd.f32 %v300, %v863
    %v868 = vxor.u32 %v866, 2147483648
    %v869 = vmul.f32 %v868, 1.442695
    %v870 = vpow.pop %v869
    %v871 = vadd.f32 %v870, 1.0
    %v872 = vrcp.pop %v871
    %v873 = vmul.f32 %v871, %v872
    %v874 = vsub.f32 1.0, %v873
    %v875 = vmul.f32 %v872, %v874
    %v876 = vadd.f32 %v872, %v875
    %vm877 = vweird.f32 %v871
    %vm878 = vweird.f32 %v872
    %vm879 = vmor %vm877, %vm878
    %v880 = vsel %vm879, %v872, %v876
    %v881 = vand.u32 2147483647, %v871
    %vm882 = vcmp.eq.f32.partialorder %v881, 8.507059e+37
    %v883 = vand.u32 %v871, 2147483648
    %v884 = vor.u32 1.1754944e-38, %v883
    %v885 = vsel %vm882, %v884, %v880
    %v886 = vmul.f32 1.0, %v885
    %v887 = vtanh.pop %v867
    %v888 = vxor.u32 %v867, 2147483648
    %v889 = vmul.f32 %v888, 1.442695
    %v890 = vpow.pop %v889
    %v891 = vadd.f32 %v890, 1.0
    %v892 = vrcp.pop %v891
    %v893 = vmul.f32 %v891, %v892
    %v894 = vsub.f32 1.0, %v893
    %v895 = vmul.f32 %v892, %v894
    %v896 = vadd.f32 %v892, %v895
    %vm897 = vweird.f32 %v891
    %vm898 = vweird.f32 %v892
    %vm899 = vmor %vm897, %vm898
    %v900 = vsel %vm899, %v892, %v896
    %v901 = vand.u32 2147483647, %v891
    %vm902 = vcmp.eq.f32.partialorder %v901, 8.507059e+37
    %v903 = vand.u32 %v891, 2147483648
    %v904 = vor.u32 1.1754944e-38, %v903
    %v905 = vsel %vm902, %v904, %v900
    %v906 = vmul.f32 1.0, %v905
    %v908 = vrot.slane %v811, 7
    %v910 = vmul.f32 %v886, %v908
    %v911 = vmul.f32 %v886, %v887
    %913 = vrot.lane.b32.xlu0 %v911, 64
    %v914 = vpop.permute.xlu0 %913
    %v916 = vadd.f32 %v910, %v914
    %v917 = vtanh.pop %v916
    %v918 = vmul.f32 %v906, %v917
    %v920 = vrot.slane %v918, 5
    %921 = vrot.lane.b32.xlu0 %v920, 64
    %v922 = vpop.permute.xlu0 %921
    %v923 = vsel %vm301, %v922, 0
    %925 = vmatpush.msra.mxu0 0.0
    %926 = vmatpush.msra.mxu0 0.0
    %927 = vmatpush.msra.mxu0 0.0
    %928 = vmatpush.msra.mxu0 0.0
    %929 = vmatpush.msra.mxu0 0.0
    %930 = vmatpush.msra.mxu0 0.0
    %931 = vmatpush.msra.mxu0 0.0
    %932 = vmatpush.msra.mxu0 0.0
    %933 = vmatpush.msra.mxu0 %v123
    %934 = vmatpush.msra.mxu0 %v121
    %935 = vmatpush.msra.mxu0 %v119
    %936 = vmatpush.msra.mxu0 %v117
    %937 = vmatpush.msra.mxu0 %v115
    %938 = vmatpush.msra.mxu0 %v113
    %939 = vmatpush.msra.mxu0 %v111
    %940 = vmatpush.msra.mxu0 %v109
    %941 = vmatmul.f32.gmra.mxu0 %v923
    %v942 = vpop.f32.mrf.mxu0
    %v943 = vadd.f32 0.0, %v942
    %944 = vdwg.mxu0
    %945 = vmatpush.msra.mxu0 0.0
    %946 = vmatpush.msra.mxu0 0.0
    %947 = vmatpush.msra.mxu0 0.0
    %948 = vmatpush.msra.mxu0 0.0
    %949 = vmatpush.msra.mxu0 0.0
    %950 = vmatpush.msra.mxu0 0.0
    %951 = vmatpush.msra.mxu0 0.0
    %952 = vmatpush.msra.mxu0 0.0
    %953 = vmatpush.msra.mxu0 %v124
    %954 = vmatpush.msra.mxu0 %v122
    %955 = vmatpush.msra.mxu0 %v120
    %956 = vmatpush.msra.mxu0 %v118
    %957 = vmatpush.msra.mxu0 %v116
    %958 = vmatpush.msra.mxu0 %v114
    %959 = vmatpush.msra.mxu0 %v112
    %960 = vmatpush.msra.mxu0 %v110
    %961 = vmatmul.f32.gmra.mxu0 %v923
    %v962 = vpop.f32.mrf.mxu0
    %v963 = vadd.f32 0.0, %v962
    %964 = vdwg.mxu0
    %v967 = vrot.slane %v943, 2
    %v968 = vrot.slane %v963, 2
    %v971 = vadd.f32 %v299, %v967
    %v972 = vadd.f32 %v300, %v968
    %v973 = vxor.u32 %v971, 2147483648
    %v974 = vmul.f32 %v973, 1.442695
    %v975 = vpow.pop %v974
    %v976 = vadd.f32 %v975, 1.0
    %v977 = vrcp.pop %v976
    %v978 = vmul.f32 %v976, %v977
    %v979 = vsub.f32 1.0, %v978
    %v980 = vmul.f32 %v977, %v979
    %v981 = vadd.f32 %v977, %v980
    %vm982 = vweird.f32 %v976
    %vm983 = vweird.f32 %v977
    %vm984 = vmor %vm982, %vm983
    %v985 = vsel %vm984, %v977, %v981
    %v986 = vand.u32 2147483647, %v976
    %vm987 = vcmp.eq.f32.partialorder %v986, 8.507059e+37
    %v988 = vand.u32 %v976, 2147483648
    %v989 = vor.u32 1.1754944e-38, %v988
    %v990 = vsel %vm987, %v989, %v985
    %v991 = vmul.f32 1.0, %v990
    %v992 = vtanh.pop %v972
    %v993 = vxor.u32 %v972, 2147483648
    %v994 = vmul.f32 %v993, 1.442695
    %v995 = vpow.pop %v994
    %v996 = vadd.f32 %v995, 1.0
    %v997 = vrcp.pop %v996
    %v998 = vmul.f32 %v996, %v997
    %v999 = vsub.f32 1.0, %v998
    %v1000 = vmul.f32 %v997, %v999
    %v1001 = vadd.f32 %v997, %v1000
    %vm1002 = vweird.f32 %v996
    %vm1003 = vweird.f32 %v997
    %vm1004 = vmor %vm1002, %vm1003
    %v1005 = vsel %vm1004, %v997, %v1001
    %v1006 = vand.u32 2147483647, %v996
    %vm1007 = vcmp.eq.f32.partialorder %v1006, 8.507059e+37
    %v1008 = vand.u32 %v996, 2147483648
    %v1009 = vor.u32 1.1754944e-38, %v1008
    %v1010 = vsel %vm1007, %v1009, %v1005
    %v1011 = vmul.f32 1.0, %v1010
    %v1013 = vrot.slane %v916, 7
    %v1015 = vmul.f32 %v991, %v1013
    %v1016 = vmul.f32 %v991, %v992
    %1018 = vrot.lane.b32.xlu0 %v1016, 64
    %v1019 = vpop.permute.xlu0 %1018
    %v1021 = vadd.f32 %v1015, %v1019
    %v1022 = vtanh.pop %v1021
    %v1023 = vmul.f32 %v1011, %v1022
    %v1025 = vrot.slane %v1023, 6
    %1026 = vrot.lane.b32.xlu0 %v1025, 64
    %v1027 = vpop.permute.xlu0 %1026
    %v1028 = vsel %vm301, %v1027, 0
    %1030 = vmatpush.msra.mxu0 0.0
    %1031 = vmatpush.msra.mxu0 0.0
    %1032 = vmatpush.msra.mxu0 0.0
    %1033 = vmatpush.msra.mxu0 0.0
    %1034 = vmatpush.msra.mxu0 0.0
    %1035 = vmatpush.msra.mxu0 0.0
    %1036 = vmatpush.msra.mxu0 0.0
    %1037 = vmatpush.msra.mxu0 0.0
    %1038 = vmatpush.msra.mxu0 %v123
    %1039 = vmatpush.msra.mxu0 %v121
    %1040 = vmatpush.msra.mxu0 %v119
    %1041 = vmatpush.msra.mxu0 %v117
    %1042 = vmatpush.msra.mxu0 %v115
    %1043 = vmatpush.msra.mxu0 %v113
    %1044 = vmatpush.msra.mxu0 %v111
    %1045 = vmatpush.msra.mxu0 %v109
    %1046 = vmatmul.f32.gmra.mxu0 %v1028
    %v1047 = vpop.f32.mrf.mxu0
    %v1048 = vadd.f32 0.0, %v1047
    %1049 = vdwg.mxu0
    %1050 = vmatpush.msra.mxu0 0.0
    %1051 = vmatpush.msra.mxu0 0.0
    %1052 = vmatpush.msra.mxu0 0.0
    %1053 = vmatpush.msra.mxu0 0.0
    %1054 = vmatpush.msra.mxu0 0.0
    %1055 = vmatpush.msra.mxu0 0.0
    %1056 = vmatpush.msra.mxu0 0.0
    %1057 = vmatpush.msra.mxu0 0.0
    %1058 = vmatpush.msra.mxu0 %v124
    %1059 = vmatpush.msra.mxu0 %v122
    %1060 = vmatpush.msra.mxu0 %v120
    %1061 = vmatpush.msra.mxu0 %v118
    %1062 = vmatpush.msra.mxu0 %v116
    %1063 = vmatpush.msra.mxu0 %v114
    %1064 = vmatpush.msra.mxu0 %v112
    %1065 = vmatpush.msra.mxu0 %v110
    %1066 = vmatmul.f32.gmra.mxu0 %v1028
    %v1067 = vpop.f32.mrf.mxu0
    %v1068 = vadd.f32 0.0, %v1067
    %1069 = vdwg.mxu0
    %v1072 = vrot.slane %v1048, 1
    %v1073 = vrot.slane %v1068, 1
    %v1076 = vadd.f32 %v299, %v1072
    %v1077 = vadd.f32 %v300, %v1073
    %v1078 = vxor.u32 %v1076, 2147483648
    %v1079 = vmul.f32 %v1078, 1.442695
    %v1080 = vpow.pop %v1079
    %v1081 = vadd.f32 %v1080, 1.0
    %v1082 = vrcp.pop %v1081
    %v1083 = vmul.f32 %v1081, %v1082
    %v1084 = vsub.f32 1.0, %v1083
    %v1085 = vmul.f32 %v1082, %v1084
    %v1086 = vadd.f32 %v1082, %v1085
    %vm1087 = vweird.f32 %v1081
    %vm1088 = vweird.f32 %v1082
    %vm1089 = vmor %vm1087, %vm1088
    %v1090 = vsel %vm1089, %v1082, %v1086
    %v1091 = vand.u32 2147483647, %v1081
    %vm1092 = vcmp.eq.f32.partialorder %v1091, 8.507059e+37
    %v1093 = vand.u32 %v1081, 2147483648
    %v1094 = vor.u32 1.1754944e-38, %v1093
    %v1095 = vsel %vm1092, %v1094, %v1090
    %v1096 = vmul.f32 1.0, %v1095
    %v1097 = vtanh.pop %v1077
    %v1098 = vxor.u32 %v1077, 2147483648
    %v1099 = vmul.f32 %v1098, 1.442695
    %v1100 = vpow.pop %v1099
    %v1101 = vadd.f32 %v1100, 1.0
    %v1102 = vrcp.pop %v1101
    %v1103 = vmul.f32 %v1101, %v1102
    %v1104 = vsub.f32 1.0, %v1103
    %v1105 = vmul.f32 %v1102, %v1104
    %v1106 = vadd.f32 %v1102, %v1105
    %vm1107 = vweird.f32 %v1101
    %vm1108 = vweird.f32 %v1102
    %vm1109 = vmor %vm1107, %vm1108
    %v1110 = vsel %vm1109, %v1102, %v1106
    %v1111 = vand.u32 2147483647, %v1101
    %vm1112 = vcmp.eq.f32.partialorder %v1111, 8.507059e+37
    %v1113 = vand.u32 %v1101, 2147483648
    %v1114 = vor.u32 1.1754944e-38, %v1113
    %v1115 = vsel %vm1112, %v1114, %v1110
    %v1116 = vmul.f32 1.0, %v1115
    %v1118 = vrot.slane %v1021, 7
    %v1120 = vmul.f32 %v1096, %v1118
    %v1121 = vmul.f32 %v1096, %v1097
    %1123 = vrot.lane.b32.xlu0 %v1121, 64
    %v1124 = vpop.permute.xlu0 %1123
    %v1126 = vadd.f32 %v1120, %v1124
    %v1127 = vtanh.pop %v1126
    %v1128 = vmul.f32 %v1116, %v1127
    %v1129 = vsel %vm171, %v394, %v498
    %v1130 = vsel %vm173, %v1129, %v603
    %v1131 = vsel %vm175, %v1130, %v708
    %v1132 = vsel %vm177, %v1131, %v813
    %v1133 = vsel %vm179, %v1132, %v918
    %v1134 = vsel %vm181, %v1133, %v1023
    %v1135 = vsel %vm183, %v1134, %v1128
    %v1137 = vrot.slane %v1128, 7
    %v1139 = vrot.slane %v1023, 5
    %v1141 = vrot.slane %v918, 3
    %v1143 = vrot.slane %v813, 1
    %v1145 = vrot.slane %v708, 7
    %v1147 = vrot.slane %v603, 5
    %v1149 = vrot.slane %v498, 3
    %v1151 = vrot.slane %v394, 1
    %v1153 = vsel %vm171, %v1137, %v1139
    %v1154 = vsel %vm173, %v1153, %v1141
    %v1155 = vsel %vm175, %v1154, %v1143
    %v1156 = vsel %vm177, %v1155, %v1145
    %v1157 = vsel %vm179, %v1156, %v1147
    %v1158 = vsel %vm181, %v1157, %v1149
    %v1159 = vsel %vm183, %v1158, %v1151
    %v1160 = vld [vmem:[%s6] sm:$0xff]
    %v1161 = vld [vmem:[%s6 + $0x8] sm:$0xff]
    %v1162 = vld [vmem:[%s6 + $0x10] sm:$0xff]
    %v1163 = vld [vmem:[%s6 + $0x18] sm:$0xff]
    %v1164 = vld [vmem:[%s7] sm:$0xff]
    %v1165 = vld [vmem:[%s7 + $0x8] sm:$0xff]
    %v1166 = vld [vmem:[%s7 + $0x10] sm:$0xff]
    %v1167 = vld [vmem:[%s7 + $0x18] sm:$0xff]
    %1169 = vrot.lane.b32.xlu0 %v1159, 32
    %v1170 = vpop.permute.xlu0 %1169
    %v1171 = vsel %vm207, %v1170, 0
    %1173 = vmatpush.msra.mxu0 0.0
    %1174 = vmatpush.msra.mxu0 0.0
    %1175 = vmatpush.msra.mxu0 0.0
    %1176 = vmatpush.msra.mxu0 0.0
    %1177 = vmatpush.msra.mxu0 0.0
    %1178 = vmatpush.msra.mxu0 0.0
    %1179 = vmatpush.msra.mxu0 0.0
    %1180 = vmatpush.msra.mxu0 0.0
    %1181 = vmatpush.msra.mxu0 0.0
    %1182 = vmatpush.msra.mxu0 0.0
    %1183 = vmatpush.msra.mxu0 0.0
    %1184 = vmatpush.msra.mxu0 0.0
    %1185 = vmatpush.msra.mxu0 %v1167
    %1186 = vmatpush.msra.mxu0 %v1166
    %1187 = vmatpush.msra.mxu0 %v1165
    %1188 = vmatpush.msra.mxu0 %v1164
    %1189 = vmatmul.f32.gmra.mxu0 %v1171
    %v1190 = vpop.f32.mrf.mxu0
    %v1191 = vadd.f32 0.0, %v1190
    %1192 = vdwg.mxu0
    %1194 = vrot.lane.b32.xlu0 %v1135, 64
    %v1195 = vpop.permute.xlu0 %1194
    %v1196 = vsel %vm207, %v1195, 0
    %1198 = vmatpush.msra.mxu0 0.0
    %1199 = vmatpush.msra.mxu0 0.0
    %1200 = vmatpush.msra.mxu0 0.0
    %1201 = vmatpush.msra.mxu0 0.0
    %1202 = vmatpush.msra.mxu0 0.0
    %1203 = vmatpush.msra.mxu0 0.0
    %1204 = vmatpush.msra.mxu0 0.0
    %1205 = vmatpush.msra.mxu0 0.0
    %1206 = vmatpush.msra.mxu0 0.0
    %1207 = vmatpush.msra.mxu0 0.0
    %1208 = vmatpush.msra.mxu0 0.0
    %1209 = vmatpush.msra.mxu0 0.0
    %1210 = vmatpush.msra.mxu0 %v1163
    %1211 = vmatpush.msra.mxu0 %v1162
    %1212 = vmatpush.msra.mxu0 %v1161
    %1213 = vmatpush.msra.mxu0 %v1160
    %1214 = vmatmul.f32.gmra.mxu0 %v1196
    %v1215 = vpop.f32.mrf.mxu0
    %v1216 = vadd.f32 %v1191, %v1215
    %1217 = vdwg.mxu0
    %v1218 = vld [vmem:[%s8] sm:$0x1]
    %v1220 = vperm.slane %v1218, 0
    %v1222 = vadd.f32 %v1216, %v1220
    %vm1223 = vcmask 64512
    %v1224 = vsel %vm1223, %v1222, -inf
    %1225 = vmax.xlane.f32.xlu0 %v1224
    %v1226 = vpop.xlane.xlu0 %1225
    %v1227 = vsub.f32 %v1222, %v1226
    %v1228 = vmul.f32 %v1227, 1.442695
    %v1229 = vpow.pop %v1228
    %v1230 = vsel %vm1223, %v1229, 0.0
    %1231 = vadd.xlane.f32.xlu0 %v1230
    %v1232 = vpop.xlane.xlu0 %1231
    %v1233 = vlog2.pop %v1232
    %v1234 = vmul.f32 %v1233, 0.6931472
    %v1235 = vsub.f32 %v1227, %v1234
    %1236 = vst.msk [vmem:[#allocation10] sm:$0xff] %vm1223, %v1235
    // Predicated region
    $region54: #{lstm_tagger_forward.1} parent=1 // pred_check
      _
    $region55: #{lstm_tagger_forward.1} parent=1 // pred_check_branch
      %1238 = sbr.rel (0) target = $region57
    $region56: #{lstm_tagger_forward.1} parent=1 // pred_region
      %1240 = vsyncadd [#allocation4], 0
      %s1242 = sshll.u32 [#allocation10], 4
      %s1243 = int_to_ptr.vmem [resolvable:$true] %s1242
      %s1244 = sshll.u32 %s9, 4
      %s1245 = int_to_ptr.hbm [resolvable:$true] %s1244
      %1247 = dma.vmem_to_hbm [thread:$0]  %s1243, 128, %s1245, [#allocation4]
    $region57: #{lstm_tagger_forward.1} parent=1 // pred_fallthru
      _
    // Predicated region
    $region58: #{lstm_tagger_forward.1} parent=1 // pred_check
      _
    $region59: #{lstm_tagger_forward.1} parent=1 // pred_check_branch
      %1249 = sbr.rel (0) target = $region61
    $region60: #{lstm_tagger_forward.1} parent=1 // pred_region
      %1251 = dma.done [#allocation4], 128
    $region61: #{lstm_tagger_forward.1} parent=1 // pred_fallthru
      _
    %1252 = vsyncpa [#allocation3], 1
    %1253 = vsyncpa [#allocation8], 1
    %1254 = vsyncpa [#allocation4], 1
    %1255 = vsyncpa [#allocation5], 1

</llo_original>
